<compile_context>
chip_gen: v7x
topology: tpu7x:2x2x1
jax: 0.10.0
libtpu: 0.0.40
codegen_flags: <defaults>
</compile_context>

<pallas_src>
import jax
import jax.numpy as jnp
from jax import lax
from jax.experimental import pallas as pl

EPS = 1e-5


def resnet_layer(x, w1, b1, g1, bt1, w2, b2, g2, bt2):
    """x: (N, H, W, C) f32; w*: (3, 3, C, C) HWIO; b*/g*/bt*: (1, C) or (C,)."""
    N, H, W, C = x.shape
    NH, WC = N * H, W * C
    inv_count = 1.0 / float(N * H * W)

    # ------- wrapper-side parameter plumbing (weights only, done once) --------
    def band(w_hwio):
        """(3,3,C,C) HWIO -> (3, W*C, W*C) block-banded matrices, one per dy."""
        mats = []
        for dy in range(3):
            m = jnp.zeros((WC, WC), jnp.float32)
            for dx in range(3):
                m = m + jnp.kron(jnp.eye(W, k=1 - dx, dtype=jnp.float32),
                                 w_hwio[dy, dx].astype(jnp.float32))
            mats.append(m)
        return jnp.stack(mats).astype(jnp.bfloat16)

    def tile_c(v):  # per-channel (C,) -> lane-dense (1, W*C)
        return jnp.tile(jnp.asarray(v, jnp.float32).reshape(1, C), (1, W))

    B1, B2 = band(w1), band(w2)
    b1t, g1t, bt1t = tile_c(b1), tile_c(g1), tile_c(bt1)
    b2t, g2t, bt2t = tile_c(b2), tile_c(g2), tile_c(bt2)

    # Per-channel reduce / broadcast matrices for BN statistics.
    G = jnp.tile(jnp.eye(C, dtype=jnp.float32), (1, W))      # (C, W*C)
    GT = G.T                                                 # (W*C, C)

    # Row-shift matrices for the dy = 0 / 2 taps; image-boundary rows are zero,
    # implementing the SAME zero padding along H exactly.
    r = jnp.arange(NH)
    sdn = (jnp.eye(NH, k=-1, dtype=jnp.float32)
           * ((r % H) != 0)[:, None].astype(jnp.float32)).astype(jnp.bfloat16)
    sup = (jnp.eye(NH, k=1, dtype=jnp.float32)
           * ((r % H) != H - 1)[:, None].astype(jnp.float32)).astype(jnp.bfloat16)

    x_flat = x.reshape(NH, WC)

    # ------------------------------- kernel -----------------------------------
    def kernel(x_ref, sdn_ref, sup_ref, G_ref, GT_ref,
               B1_ref, b1_ref, g1_ref, bt1_ref,
               B2_ref, b2_ref, g2_ref, bt2_ref, o_ref):

        def conv3x3(xf32, B_ref, bias_ref):
            xb = xf32.astype(jnp.bfloat16)
            # dy-shifted operands via 0/1 matmuls (exact; boundary rows zeroed).
            x_dn = jnp.dot(sdn_ref[...], xb,
                           preferred_element_type=jnp.float32).astype(jnp.bfloat16)
            x_up = jnp.dot(sup_ref[...], xb,
                           preferred_element_type=jnp.float32).astype(jnp.bfloat16)
            # Three fat matmuls: (32, 256) @ (256, 256), bf16 in / f32 acc.
            acc = jnp.dot(x_dn, B_ref[0], preferred_element_type=jnp.float32)
            acc = acc + jnp.dot(xb, B_ref[1], preferred_element_type=jnp.float32)
            acc = acc + jnp.dot(x_up, B_ref[2], preferred_element_type=jnp.float32)
            return acc + bias_ref[...]

        def batchnorm(y, g_ref, bt_ref):
            # Per-channel mean/var over (N, H, W): sublane row-sum (XLU), then a
            # (1,WC)@(WC,C) reduce and a (1,C)@(C,WC) broadcast on the MXU.
            rowsum = jnp.sum(y, axis=0, keepdims=True)                     # (1, WC)
            mean_c = jnp.dot(rowsum, GT_ref[...],
                             preferred_element_type=jnp.float32) * inv_count
            mean_b = jnp.dot(mean_c, G_ref[...],
                             preferred_element_type=jnp.float32)           # (1, WC)
            d = y - mean_b
            sqsum = jnp.sum(d * d, axis=0, keepdims=True)
            var_c = jnp.dot(sqsum, GT_ref[...],
                            preferred_element_type=jnp.float32) * inv_count
            var_b = jnp.dot(var_c, G_ref[...],
                            preferred_element_type=jnp.float32)
            return d * lax.rsqrt(var_b + EPS) * g_ref[...] + bt_ref[...]

        residual = x_ref[...]                                              # f32
        h1 = jnp.maximum(
            batchnorm(conv3x3(residual, B1_ref, b1_ref), g1_ref, bt1_ref), 0.0)
        h2 = batchnorm(conv3x3(h1, B2_ref, b2_ref), g2_ref, bt2_ref)
        o_ref[...] = jnp.maximum(h2 + residual, 0.0)

    full = lambda shape: pl.BlockSpec(shape, lambda: (0,) * len(shape))
    out_flat = pl.pallas_call(
        kernel,
        out_shape=jax.ShapeDtypeStruct((NH, WC), jnp.float32),
        grid=(),
        in_specs=[
            full((NH, WC)),                                   # x (flat, lane-dense)
            full((NH, NH)), full((NH, NH)),                   # row-shift mats
            full((C, WC)), full((WC, C)),                     # BN reduce/broadcast
            full((3, WC, WC)),                                # banded conv1 weights
            full((1, WC)), full((1, WC)), full((1, WC)),      # b1, g1, beta1
            full((3, WC, WC)),                                # banded conv2 weights
            full((1, WC)), full((1, WC)), full((1, WC)),      # b2, g2, beta2
        ],
        out_specs=full((NH, WC)),
    )(x_flat, sdn, sup, G, GT, B1, b1t, g1t, bt1t, B2, b2t, g2t, bt2t)
    return out_flat.reshape(N, H, W, C)


def ref_forward(x, w1, b1, g1, bt1, w2, b2, g2, bt2, cast_bf16=False):
    """Pure-JAX reference == PyTorch module in train mode (batch-stat BN)."""
    def conv(h, w, b):
        if cast_bf16:
            h, w = h.astype(jnp.bfloat16), w.astype(jnp.bfloat16)
        y = lax.conv_general_dilated(
            h, w, window_strides=(1, 1), padding="SAME",
            dimension_numbers=("NHWC", "HWIO", "NHWC"),
            preferred_element_type=jnp.float32)
        return y + b.reshape(1, 1, 1, -1)

    def bn(h, g, bt):
        m = h.mean(axis=(0, 1, 2), keepdims=True)
        v = ((h - m) ** 2).mean(axis=(0, 1, 2), keepdims=True)
        return (h - m) * lax.rsqrt(v + EPS) * g.reshape(1, 1, 1, -1) \
            + bt.reshape(1, 1, 1, -1)

    h = jax.nn.relu(bn(conv(x, w1, b1), g1, bt1))
    h = bn(conv(h, w2, b2), g2, bt2)
    return jax.nn.relu(h + x)


if __name__ == "__main__":
    N, H, W, C = 2, 16, 16, 16  # units = C = 16

    key = jax.random.PRNGKey(0)
    kx, kw1, kb1, kw2, kb2 = jax.random.split(key, 5)

    x = jax.random.normal(kx, (N, H, W, C), dtype=jnp.float32)

    # Conv2d(units, units, 3) parameters, deterministic init (~kaiming scale).
    fan_in = 3 * 3 * C
    scale = (2.0 / fan_in) ** 0.5
    w1 = jax.random.normal(kw1, (3, 3, C, C), dtype=jnp.float32) * scale  # HWIO
    b1 = jax.random.normal(kb1, (1, C), dtype=jnp.float32) * 0.05
    w2 = jax.random.normal(kw2, (3, 3, C, C), dtype=jnp.float32) * scale
    b2 = jax.random.normal(kb2, (1, C), dtype=jnp.float32) * 0.05

    # BatchNorm2d defaults: weight (gamma) = 1, bias (beta) = 0.
    g1 = jnp.ones((1, C), jnp.float32)
    bt1 = jnp.zeros((1, C), jnp.float32)
    g2 = jnp.ones((1, C), jnp.float32)
    bt2 = jnp.zeros((1, C), jnp.float32)

    out = jax.block_until_ready(
        resnet_layer(x, w1, b1, g1, bt1, w2, b2, g2, bt2))
    assert out.shape == (N, H, W, C)

    # Tight structural check: reference that feeds the convs the same bf16
    # operands (f32 accumulation) — should agree to f32 round-off plus rare
    # bf16 double-rounding at the second conv's input.
    ref_b = jax.block_until_ready(
        ref_forward(x, w1, b1, g1, bt1, w2, b2, g2, bt2, cast_bf16=True))
    err_b = float(jnp.max(jnp.abs(out - ref_b)))
    assert jnp.allclose(out, ref_b, rtol=1e-2, atol=1e-2), err_b

    # Fidelity check vs the all-f32 reference (== PyTorch module, train mode).
    # The only gap is bf16 rounding of the conv inputs/weights (~1e-2 worst
    # case); accumulation, BN and the residual path are all f32.
    ref_f = jax.block_until_ready(
        ref_forward(x, w1, b1, g1, bt1, w2, b2, g2, bt2, cast_bf16=False))
    err_f = float(jnp.max(jnp.abs(out - ref_f)))
    assert jnp.allclose(out, ref_f, rtol=3e-2, atol=3e-2), err_f

    print("KERNEL_OK")
</pallas_src>

<mosaic_0001>
module attributes {stable_mosaic.version = 11 : i64} {
  func.func @kernel(%arg0: memref<32x256xf32, #tpu.memory_space<vmem>>, %arg1: memref<32x32xbf16, #tpu.memory_space<vmem>>, %arg2: memref<32x32xbf16, #tpu.memory_space<vmem>>, %arg3: memref<16x256xf32, #tpu.memory_space<vmem>>, %arg4: memref<256x16xf32, #tpu.memory_space<vmem>>, %arg5: memref<3x256x256xbf16, #tpu.memory_space<vmem>>, %arg6: memref<1x256xf32, #tpu.memory_space<vmem>>, %arg7: memref<1x256xf32, #tpu.memory_space<vmem>>, %arg8: memref<1x256xf32, #tpu.memory_space<vmem>>, %arg9: memref<3x256x256xbf16, #tpu.memory_space<vmem>>, %arg10: memref<1x256xf32, #tpu.memory_space<vmem>>, %arg11: memref<1x256xf32, #tpu.memory_space<vmem>>, %arg12: memref<1x256xf32, #tpu.memory_space<vmem>>, %arg13: memref<32x256xf32, #tpu.memory_space<vmem>>) attributes {dimension_semantics = [], scalar_prefetch = 0 : i64, scratch_operands = 0 : i64, tpu.core_type = #tpu.core_type<tc>} {
    %c0 = arith.constant 0 : index
    %c0_0 = arith.constant 0 : index
    %0 = vector.load %arg0[%c0, %c0_0] : memref<32x256xf32, #tpu.memory_space<vmem>>, vector<32x256xf32>
    %1 = arith.truncf %0 : vector<32x256xf32> to vector<32x256xbf16>
    %c0_1 = arith.constant 0 : index
    %c0_2 = arith.constant 0 : index
    %2 = vector.load %arg1[%c0_1, %c0_2] : memref<32x32xbf16, #tpu.memory_space<vmem>>, vector<32x32xbf16>
    %cst = arith.constant dense<0.000000e+00> : vector<32x256xf32>
    %3 = tpu.matmul %2, %1, %cst {dimension_numbers = #tpu.dot_dimension_numbers<[1], [0], [0], [1], [0, 0, 1, 1], [], []>} : vector<32x32xbf16>, vector<32x256xbf16>, vector<32x256xf32> -> vector<32x256xf32>
    %4 = arith.truncf %3 : vector<32x256xf32> to vector<32x256xbf16>
    %c0_3 = arith.constant 0 : index
    %c0_4 = arith.constant 0 : index
    %5 = vector.load %arg2[%c0_3, %c0_4] : memref<32x32xbf16, #tpu.memory_space<vmem>>, vector<32x32xbf16>
    %cst_5 = arith.constant dense<0.000000e+00> : vector<32x256xf32>
    %6 = tpu.matmul %5, %1, %cst_5 {dimension_numbers = #tpu.dot_dimension_numbers<[1], [0], [0], [1], [0, 0, 1, 1], [], []>} : vector<32x32xbf16>, vector<32x256xbf16>, vector<32x256xf32> -> vector<32x256xf32>
    %7 = arith.truncf %6 : vector<32x256xf32> to vector<32x256xbf16>
    %c0_6 = arith.constant 0 : index
    %c0_7 = arith.constant 0 : index
    %c0_8 = arith.constant 0 : index
    %8 = vector.load %arg5[%c0_6, %c0_7, %c0_8] : memref<3x256x256xbf16, #tpu.memory_space<vmem>>, vector<1x256x256xbf16>
    %9 = vector.shape_cast %8 : vector<1x256x256xbf16> to vector<256x256xbf16>
    %cst_9 = arith.constant dense<0.000000e+00> : vector<32x256xf32>
    %10 = tpu.matmul %4, %9, %cst_9 {dimension_numbers = #tpu.dot_dimension_numbers<[1], [0], [0], [1], [0, 0, 1, 1], [], []>} : vector<32x256xbf16>, vector<256x256xbf16>, vector<32x256xf32> -> vector<32x256xf32>
    %c1 = arith.constant 1 : index
    %c0_10 = arith.constant 0 : index
    %c0_11 = arith.constant 0 : index
    %11 = vector.load %arg5[%c1, %c0_10, %c0_11] : memref<3x256x256xbf16, #tpu.memory_space<vmem>>, vector<1x256x256xbf16>
    %12 = vector.shape_cast %11 : vector<1x256x256xbf16> to vector<256x256xbf16>
    %cst_12 = arith.constant dense<0.000000e+00> : vector<32x256xf32>
    %13 = tpu.matmul %1, %12, %cst_12 {dimension_numbers = #tpu.dot_dimension_numbers<[1], [0], [0], [1], [0, 0, 1, 1], [], []>} : vector<32x256xbf16>, vector<256x256xbf16>, vector<32x256xf32> -> vector<32x256xf32>
    %14 = arith.addf %10, %13 : vector<32x256xf32>
    %c2 = arith.constant 2 : index
    %c0_13 = arith.constant 0 : index
    %c0_14 = arith.constant 0 : index
    %15 = vector.load %arg5[%c2, %c0_13, %c0_14] : memref<3x256x256xbf16, #tpu.memory_space<vmem>>, vector<1x256x256xbf16>
    %16 = vector.shape_cast %15 : vector<1x256x256xbf16> to vector<256x256xbf16>
    %cst_15 = arith.constant dense<0.000000e+00> : vector<32x256xf32>
    %17 = tpu.matmul %7, %16, %cst_15 {dimension_numbers = #tpu.dot_dimension_numbers<[1], [0], [0], [1], [0, 0, 1, 1], [], []>} : vector<32x256xbf16>, vector<256x256xbf16>, vector<32x256xf32> -> vector<32x256xf32>
    %18 = arith.addf %14, %17 : vector<32x256xf32>
    %c0_16 = arith.constant 0 : index
    %c0_17 = arith.constant 0 : index
    %19 = vector.load %arg6[%c0_16, %c0_17] : memref<1x256xf32, #tpu.memory_space<vmem>>, vector<1x256xf32>
    %20 = vector.broadcast %19 : vector<1x256xf32> to vector<32x256xf32>
    %21 = arith.addf %18, %20 : vector<32x256xf32>
    %cst_18 = arith.constant dense<0.000000e+00> : vector<256xf32>
    %22 = vector.multi_reduction <add>, %21, %cst_18 [0] : vector<32x256xf32> to vector<256xf32>
    %23 = vector.shape_cast %22 : vector<256xf32> to vector<1x256xf32>
    %c0_19 = arith.constant 0 : index
    %c0_20 = arith.constant 0 : index
    %24 = vector.load %arg4[%c0_19, %c0_20] : memref<256x16xf32, #tpu.memory_space<vmem>>, vector<256x16xf32>
    %cst_21 = arith.constant dense<0.000000e+00> : vector<1x16xf32>
    %25 = tpu.matmul %23, %24, %cst_21 {dimension_numbers = #tpu.dot_dimension_numbers<[1], [0], [0], [1], [0, 0, 1, 1], [], []>} : vector<1x256xf32>, vector<256x16xf32>, vector<1x16xf32> -> vector<1x16xf32>
    %cst_22 = arith.constant 0.001953125 : f32
    %26 = vector.broadcast %cst_22 : f32 to vector<1x16xf32>
    %27 = arith.mulf %25, %26 : vector<1x16xf32>
    %c0_23 = arith.constant 0 : index
    %c0_24 = arith.constant 0 : index
    %28 = vector.load %arg3[%c0_23, %c0_24] : memref<16x256xf32, #tpu.memory_space<vmem>>, vector<16x256xf32>
    %cst_25 = arith.constant dense<0.000000e+00> : vector<1x256xf32>
    %29 = tpu.matmul %27, %28, %cst_25 {dimension_numbers = #tpu.dot_dimension_numbers<[1], [0], [0], [1], [0, 0, 1, 1], [], []>} : vector<1x16xf32>, vector<16x256xf32>, vector<1x256xf32> -> vector<1x256xf32>
    %30 = vector.broadcast %29 : vector<1x256xf32> to vector<32x256xf32>
    %31 = arith.subf %21, %30 : vector<32x256xf32>
    %32 = arith.mulf %31, %31 : vector<32x256xf32>
    %cst_26 = arith.constant dense<0.000000e+00> : vector<256xf32>
    %33 = vector.multi_reduction <add>, %32, %cst_26 [0] : vector<32x256xf32> to vector<256xf32>
    %34 = vector.shape_cast %33 : vector<256xf32> to vector<1x256xf32>
    %c0_27 = arith.constant 0 : index
    %c0_28 = arith.constant 0 : index
    %35 = vector.load %arg4[%c0_27, %c0_28] : memref<256x16xf32, #tpu.memory_space<vmem>>, vector<256x16xf32>
    %cst_29 = arith.constant dense<0.000000e+00> : vector<1x16xf32>
    %36 = tpu.matmul %34, %35, %cst_29 {dimension_numbers = #tpu.dot_dimension_numbers<[1], [0], [0], [1], [0, 0, 1, 1], [], []>} : vector<1x256xf32>, vector<256x16xf32>, vector<1x16xf32> -> vector<1x16xf32>
    %cst_30 = arith.constant 0.001953125 : f32
    %37 = vector.broadcast %cst_30 : f32 to vector<1x16xf32>
    %38 = arith.mulf %36, %37 : vector<1x16xf32>
    %c0_31 = arith.constant 0 : index
    %c0_32 = arith.constant 0 : index
    %39 = vector.load %arg3[%c0_31, %c0_32] : memref<16x256xf32, #tpu.memory_space<vmem>>, vector<16x256xf32>
    %cst_33 = arith.constant dense<0.000000e+00> : vector<1x256xf32>
    %40 = tpu.matmul %38, %39, %cst_33 {dimension_numbers = #tpu.dot_dimension_numbers<[1], [0], [0], [1], [0, 0, 1, 1], [], []>} : vector<1x16xf32>, vector<16x256xf32>, vector<1x256xf32> -> vector<1x256xf32>
    %cst_34 = arith.constant 9.99999974E-6 : f32
    %41 = vector.broadcast %cst_34 : f32 to vector<1x256xf32>
    %42 = arith.addf %40, %41 : vector<1x256xf32>
    %43 = math.rsqrt %42 : vector<1x256xf32>
    %44 = vector.broadcast %43 : vector<1x256xf32> to vector<32x256xf32>
    %45 = arith.mulf %31, %44 : vector<32x256xf32>
    %c0_35 = arith.constant 0 : index
    %c0_36 = arith.constant 0 : index
    %46 = vector.load %arg7[%c0_35, %c0_36] : memref<1x256xf32, #tpu.memory_space<vmem>>, vector<1x256xf32>
    %47 = vector.broadcast %46 : vector<1x256xf32> to vector<32x256xf32>
    %48 = arith.mulf %45, %47 : vector<32x256xf32>
    %c0_37 = arith.constant 0 : index
    %c0_38 = arith.constant 0 : index
    %49 = vector.load %arg8[%c0_37, %c0_38] : memref<1x256xf32, #tpu.memory_space<vmem>>, vector<1x256xf32>
    %50 = vector.broadcast %49 : vector<1x256xf32> to vector<32x256xf32>
    %51 = arith.addf %48, %50 : vector<32x256xf32>
    %cst_39 = arith.constant 0.000000e+00 : f32
    %52 = vector.broadcast %cst_39 : f32 to vector<32x256xf32>
    %53 = arith.maximumf %51, %52 : vector<32x256xf32>
    %54 = arith.truncf %53 : vector<32x256xf32> to vector<32x256xbf16>
    %c0_40 = arith.constant 0 : index
    %c0_41 = arith.constant 0 : index
    %55 = vector.load %arg1[%c0_40, %c0_41] : memref<32x32xbf16, #tpu.memory_space<vmem>>, vector<32x32xbf16>
    %cst_42 = arith.constant dense<0.000000e+00> : vector<32x256xf32>
    %56 = tpu.matmul %55, %54, %cst_42 {dimension_numbers = #tpu.dot_dimension_numbers<[1], [0], [0], [1], [0, 0, 1, 1], [], []>} : vector<32x32xbf16>, vector<32x256xbf16>, vector<32x256xf32> -> vector<32x256xf32>
    %57 = arith.truncf %56 : vector<32x256xf32> to vector<32x256xbf16>
    %c0_43 = arith.constant 0 : index
    %c0_44 = arith.constant 0 : index
    %58 = vector.load %arg2[%c0_43, %c0_44] : memref<32x32xbf16, #tpu.memory_space<vmem>>, vector<32x32xbf16>
    %cst_45 = arith.constant dense<0.000000e+00> : vector<32x256xf32>
    %59 = tpu.matmul %58, %54, %cst_45 {dimension_numbers = #tpu.dot_dimension_numbers<[1], [0], [0], [1], [0, 0, 1, 1], [], []>} : vector<32x32xbf16>, vector<32x256xbf16>, vector<32x256xf32> -> vector<32x256xf32>
    %60 = arith.truncf %59 : vector<32x256xf32> to vector<32x256xbf16>
    %c0_46 = arith.constant 0 : index
    %c0_47 = arith.constant 0 : index
    %c0_48 = arith.constant 0 : index
    %61 = vector.load %arg9[%c0_46, %c0_47, %c0_48] : memref<3x256x256xbf16, #tpu.memory_space<vmem>>, vector<1x256x256xbf16>
    %62 = vector.shape_cast %61 : vector<1x256x256xbf16> to vector<256x256xbf16>
    %cst_49 = arith.constant dense<0.000000e+00> : vector<32x256xf32>
    %63 = tpu.matmul %57, %62, %cst_49 {dimension_numbers = #tpu.dot_dimension_numbers<[1], [0], [0], [1], [0, 0, 1, 1], [], []>} : vector<32x256xbf16>, vector<256x256xbf16>, vector<32x256xf32> -> vector<32x256xf32>
    %c1_50 = arith.constant 1 : index
    %c0_51 = arith.constant 0 : index
    %c0_52 = arith.constant 0 : index
    %64 = vector.load %arg9[%c1_50, %c0_51, %c0_52] : memref<3x256x256xbf16, #tpu.memory_space<vmem>>, vector<1x256x256xbf16>
    %65 = vector.shape_cast %64 : vector<1x256x256xbf16> to vector<256x256xbf16>
    %cst_53 = arith.constant dense<0.000000e+00> : vector<32x256xf32>
    %66 = tpu.matmul %54, %65, %cst_53 {dimension_numbers = #tpu.dot_dimension_numbers<[1], [0], [0], [1], [0, 0, 1, 1], [], []>} : vector<32x256xbf16>, vector<256x256xbf16>, vector<32x256xf32> -> vector<32x256xf32>
    %67 = arith.addf %63, %66 : vector<32x256xf32>
    %c2_54 = arith.constant 2 : index
    %c0_55 = arith.constant 0 : index
    %c0_56 = arith.constant 0 : index
    %68 = vector.load %arg9[%c2_54, %c0_55, %c0_56] : memref<3x256x256xbf16, #tpu.memory_space<vmem>>, vector<1x256x256xbf16>
    %69 = vector.shape_cast %68 : vector<1x256x256xbf16> to vector<256x256xbf16>
    %cst_57 = arith.constant dense<0.000000e+00> : vector<32x256xf32>
    %70 = tpu.matmul %60, %69, %cst_57 {dimension_numbers = #tpu.dot_dimension_numbers<[1], [0], [0], [1], [0, 0, 1, 1], [], []>} : vector<32x256xbf16>, vector<256x256xbf16>, vector<32x256xf32> -> vector<32x256xf32>
    %71 = arith.addf %67, %70 : vector<32x256xf32>
    %c0_58 = arith.constant 0 : index
    %c0_59 = arith.constant 0 : index
    %72 = vector.load %arg10[%c0_58, %c0_59] : memref<1x256xf32, #tpu.memory_space<vmem>>, vector<1x256xf32>
    %73 = vector.broadcast %72 : vector<1x256xf32> to vector<32x256xf32>
    %74 = arith.addf %71, %73 : vector<32x256xf32>
    %cst_60 = arith.constant dense<0.000000e+00> : vector<256xf32>
    %75 = vector.multi_reduction <add>, %74, %cst_60 [0] : vector<32x256xf32> to vector<256xf32>
    %76 = vector.shape_cast %75 : vector<256xf32> to vector<1x256xf32>
    %c0_61 = arith.constant 0 : index
    %c0_62 = arith.constant 0 : index
    %77 = vector.load %arg4[%c0_61, %c0_62] : memref<256x16xf32, #tpu.memory_space<vmem>>, vector<256x16xf32>
    %cst_63 = arith.constant dense<0.000000e+00> : vector<1x16xf32>
    %78 = tpu.matmul %76, %77, %cst_63 {dimension_numbers = #tpu.dot_dimension_numbers<[1], [0], [0], [1], [0, 0, 1, 1], [], []>} : vector<1x256xf32>, vector<256x16xf32>, vector<1x16xf32> -> vector<1x16xf32>
    %cst_64 = arith.constant 0.001953125 : f32
    %79 = vector.broadcast %cst_64 : f32 to vector<1x16xf32>
    %80 = arith.mulf %78, %79 : vector<1x16xf32>
    %c0_65 = arith.constant 0 : index
    %c0_66 = arith.constant 0 : index
    %81 = vector.load %arg3[%c0_65, %c0_66] : memref<16x256xf32, #tpu.memory_space<vmem>>, vector<16x256xf32>
    %cst_67 = arith.constant dense<0.000000e+00> : vector<1x256xf32>
    %82 = tpu.matmul %80, %81, %cst_67 {dimension_numbers = #tpu.dot_dimension_numbers<[1], [0], [0], [1], [0, 0, 1, 1], [], []>} : vector<1x16xf32>, vector<16x256xf32>, vector<1x256xf32> -> vector<1x256xf32>
    %83 = vector.broadcast %82 : vector<1x256xf32> to vector<32x256xf32>
    %84 = arith.subf %74, %83 : vector<32x256xf32>
    %85 = arith.mulf %84, %84 : vector<32x256xf32>
    %cst_68 = arith.constant dense<0.000000e+00> : vector<256xf32>
    %86 = vector.multi_reduction <add>, %85, %cst_68 [0] : vector<32x256xf32> to vector<256xf32>
    %87 = vector.shape_cast %86 : vector<256xf32> to vector<1x256xf32>
    %c0_69 = arith.constant 0 : index
    %c0_70 = arith.constant 0 : index
    %88 = vector.load %arg4[%c0_69, %c0_70] : memref<256x16xf32, #tpu.memory_space<vmem>>, vector<256x16xf32>
    %cst_71 = arith.constant dense<0.000000e+00> : vector<1x16xf32>
    %89 = tpu.matmul %87, %88, %cst_71 {dimension_numbers = #tpu.dot_dimension_numbers<[1], [0], [0], [1], [0, 0, 1, 1], [], []>} : vector<1x256xf32>, vector<256x16xf32>, vector<1x16xf32> -> vector<1x16xf32>
    %cst_72 = arith.constant 0.001953125 : f32
    %90 = vector.broadcast %cst_72 : f32 to vector<1x16xf32>
    %91 = arith.mulf %89, %90 : vector<1x16xf32>
    %c0_73 = arith.constant 0 : index
    %c0_74 = arith.constant 0 : index
    %92 = vector.load %arg3[%c0_73, %c0_74] : memref<16x256xf32, #tpu.memory_space<vmem>>, vector<16x256xf32>
    %cst_75 = arith.constant dense<0.000000e+00> : vector<1x256xf32>
    %93 = tpu.matmul %91, %92, %cst_75 {dimension_numbers = #tpu.dot_dimension_numbers<[1], [0], [0], [1], [0, 0, 1, 1], [], []>} : vector<1x16xf32>, vector<16x256xf32>, vector<1x256xf32> -> vector<1x256xf32>
    %cst_76 = arith.constant 9.99999974E-6 : f32
    %94 = vector.broadcast %cst_76 : f32 to vector<1x256xf32>
    %95 = arith.addf %93, %94 : vector<1x256xf32>
    %96 = math.rsqrt %95 : vector<1x256xf32>
    %97 = vector.broadcast %96 : vector<1x256xf32> to vector<32x256xf32>
    %98 = arith.mulf %84, %97 : vector<32x256xf32>
    %c0_77 = arith.constant 0 : index
    %c0_78 = arith.constant 0 : index
    %99 = vector.load %arg11[%c0_77, %c0_78] : memref<1x256xf32, #tpu.memory_space<vmem>>, vector<1x256xf32>
    %100 = vector.broadcast %99 : vector<1x256xf32> to vector<32x256xf32>
    %101 = arith.mulf %98, %100 : vector<32x256xf32>
    %c0_79 = arith.constant 0 : index
    %c0_80 = arith.constant 0 : index
    %102 = vector.load %arg12[%c0_79, %c0_80] : memref<1x256xf32, #tpu.memory_space<vmem>>, vector<1x256xf32>
    %103 = vector.broadcast %102 : vector<1x256xf32> to vector<32x256xf32>
    %104 = arith.addf %101, %103 : vector<32x256xf32>
    %105 = arith.addf %104, %0 : vector<32x256xf32>
    %cst_81 = arith.constant 0.000000e+00 : f32
    %106 = vector.broadcast %cst_81 : f32 to vector<32x256xf32>
    %107 = arith.maximumf %105, %106 : vector<32x256xf32>
    %c0_82 = arith.constant 0 : index
    %c0_83 = arith.constant 0 : index
    %108 = vector.load %arg13[%c0_82, %c0_83] : memref<32x256xf32, #tpu.memory_space<vmem>>, vector<32x256xf32>
    tpu.vector_store %arg13[%c0_82, %c0_83], %107 {strides = array<i32>} : memref<32x256xf32, #tpu.memory_space<vmem>>, vector<32x256xf32>,
    return
  }
}

</mosaic_0001>

<llo_original>
// kernel: tpu_custom_call.1
$region0: #{tpu_custom_call.1}
  #allocation0 [shape = 'u32[]', space=smem, size = 0x4, offset = 0x4, fixed_abs, tag = 'smem constant byte address 0x4 - core index']
  #allocation1 [shape = 'u32[144,128]{1,0:T(1,128)}', space=vmem, size = 0x12000, scoped, tag = 'internal scratch']
  %s0 = inlined_call_operand.vmem [shape: f32[32,256], index: 0, kind: input, shape index: {}]
  %s1 = inlined_call_operand.vmem [shape: bf16[32,32], index: 1, kind: input, shape index: {}]
  %s2 = inlined_call_operand.vmem [shape: bf16[32,32], index: 2, kind: input, shape index: {}]
  %s3 = inlined_call_operand.vmem [shape: f32[16,256], index: 3, kind: input, shape index: {}]
  %s4 = inlined_call_operand.vmem [shape: f32[256,16], index: 4, kind: input, shape index: {}]
  %s5 = inlined_call_operand.hbm [shape: bf16[3,256,256], index: 5, kind: input, shape index: {}]
  %s6 = inlined_call_operand.vmem [shape: f32[1,256], index: 6, kind: input, shape index: {}]
  %s7 = inlined_call_operand.vmem [shape: f32[1,256], index: 7, kind: input, shape index: {}]
  %s8 = inlined_call_operand.vmem [shape: f32[1,256], index: 8, kind: input, shape index: {}]
  %s9 = inlined_call_operand.hbm [shape: bf16[3,256,256], index: 9, kind: input, shape index: {}]
  %s10 = inlined_call_operand.vmem [shape: f32[1,256], index: 10, kind: input, shape index: {}]
  %s11 = inlined_call_operand.vmem [shape: f32[1,256], index: 11, kind: input, shape index: {}]
  %s12 = inlined_call_operand.vmem [shape: f32[1,256], index: 12, kind: input, shape index: {}]
  %s13 = inlined_call_operand.hbm [shape: f32[32,256], index: 13, kind: output, shape index: {}]
  %s14 = sld [smem:[#allocation0]]
  $region70: #{tpu_custom_call.1} parent=0
    _
  %s16 = ssub.s32 1, %s14
  %s17 = scalar_select 0, %s16, %s14
  $region1: #{tpu_custom_call.1} parent=0
    #allocation2 [shape = 'u8[393216]{0}', space=vmem, size = 0x60000, scoped, tag = 'input window, operand 5, single buffered']
    #allocation3 [shape = 's32[1]{0}', space=sflag, size = 0x4, scoped, tag = 'scoped memory for tpu_custom_call.1']
    #allocation4 [shape = 's32[1]{0}', space=sflag, size = 0x4, scoped, tag = 'scoped memory for tpu_custom_call.1']
    #allocation5 [shape = 'u8[393216]{0}', space=vmem, size = 0x60000, scoped, tag = 'input window, operand 9, single buffered']
    #allocation6 [shape = 's32[1]{0}', space=sflag, size = 0x4, scoped, tag = 'scoped memory for tpu_custom_call.1']
    #allocation7 [shape = 'u8[32768]{0}', space=vmem, size = 0x8000, scoped, tag = 'output window, operand 0, single buffered']
    %18 = vsyncpa [#allocation3], 0
    %19 = vsyncpa [#allocation6], 0
    %20 = vsyncpa [#allocation4], 0
    // Predicated region
    $region2: #{tpu_custom_call.1} parent=1 // pred_check
      _
    $region3: #{tpu_custom_call.1} parent=1 // pred_check_branch
      %22 = sbr.rel (0) target = $region5
    $region4: #{tpu_custom_call.1} parent=1 // pred_region
      _
    $region5: #{tpu_custom_call.1} parent=1 // pred_fallthru
      _
    // Predicated region
    $region6: #{tpu_custom_call.1} parent=1 // pred_check
      _
    $region7: #{tpu_custom_call.1} parent=1 // pred_check_branch
      %24 = sbr.rel (0) target = $region9
    $region8: #{tpu_custom_call.1} parent=1 // pred_region
      _
    $region9: #{tpu_custom_call.1} parent=1 // pred_fallthru
      _
    // Predicated region
    $region10: #{tpu_custom_call.1} parent=1 // pred_check
      _
    $region11: #{tpu_custom_call.1} parent=1 // pred_check_branch
      %26 = sbr.rel (0) target = $region13
    $region12: #{tpu_custom_call.1} parent=1 // pred_region
      _
    $region13: #{tpu_custom_call.1} parent=1 // pred_fallthru
      _
    // Predicated region
    $region14: #{tpu_custom_call.1} parent=1 // pred_check
      _
    $region15: #{tpu_custom_call.1} parent=1 // pred_check_branch
      %28 = sbr.rel (0) target = $region17
    $region16: #{tpu_custom_call.1} parent=1 // pred_region
      _
    $region17: #{tpu_custom_call.1} parent=1 // pred_fallthru
      _
    // Predicated region
    $region18: #{tpu_custom_call.1} parent=1 // pred_check
      _
    $region19: #{tpu_custom_call.1} parent=1 // pred_check_branch
      %30 = sbr.rel (0) target = $region21
    $region20: #{tpu_custom_call.1} parent=1 // pred_region
      _
    $region21: #{tpu_custom_call.1} parent=1 // pred_fallthru
      _
    // Predicated region
    $region22: #{tpu_custom_call.1} parent=1 // pred_check
      _
    $region23: #{tpu_custom_call.1} parent=1 // pred_check_branch
      %32 = sbr.rel (0) target = $region25
    $region24: #{tpu_custom_call.1} parent=1 // pred_region
      %s34 = ssub.s32 12288, 12288
      %35 = vsyncadd [#allocation3], %s34
      %s36 = sshll.u32 [#allocation2], 4
      %s37 = int_to_ptr.vmem [resolvable:$true] %s36
      %42 = dma.hbm_to_vmem [thread:$0]  %s5, 12288, %s37, [#allocation3], 128, 128, 8
    $region25: #{tpu_custom_call.1} parent=1 // pred_fallthru
      _
    // Predicated region
    $region26: #{tpu_custom_call.1} parent=1 // pred_check
      _
    $region27: #{tpu_custom_call.1} parent=1 // pred_check_branch
      %44 = sbr.rel (0) target = $region29
    $region28: #{tpu_custom_call.1} parent=1 // pred_region
      _
    $region29: #{tpu_custom_call.1} parent=1 // pred_fallthru
      _
    // Predicated region
    $region30: #{tpu_custom_call.1} parent=1 // pred_check
      _
    $region31: #{tpu_custom_call.1} parent=1 // pred_check_branch
      %46 = sbr.rel (0) target = $region33
    $region32: #{tpu_custom_call.1} parent=1 // pred_region
      _
    $region33: #{tpu_custom_call.1} parent=1 // pred_fallthru
      _
    // Predicated region
    $region34: #{tpu_custom_call.1} parent=1 // pred_check
      _
    $region35: #{tpu_custom_call.1} parent=1 // pred_check_branch
      %48 = sbr.rel (0) target = $region37
    $region36: #{tpu_custom_call.1} parent=1 // pred_region
      _
    $region37: #{tpu_custom_call.1} parent=1 // pred_fallthru
      _
    // Predicated region
    $region38: #{tpu_custom_call.1} parent=1 // pred_check
      _
    $region39: #{tpu_custom_call.1} parent=1 // pred_check_branch
      %50 = sbr.rel (0) target = $region41
    $region40: #{tpu_custom_call.1} parent=1 // pred_region
      %s52 = ssub.s32 12288, 12288
      %53 = vsyncadd [#allocation6], %s52
      %s54 = sshll.u32 [#allocation5], 4
      %s55 = int_to_ptr.vmem [resolvable:$true] %s54
      %60 = dma.hbm_to_vmem [thread:$0]  %s9, 12288, %s55, [#allocation6], 128, 128, 8
    $region41: #{tpu_custom_call.1} parent=1 // pred_fallthru
      _
    // Predicated region
    $region42: #{tpu_custom_call.1} parent=1 // pred_check
      _
    $region43: #{tpu_custom_call.1} parent=1 // pred_check_branch
      %62 = sbr.rel (0) target = $region45
    $region44: #{tpu_custom_call.1} parent=1 // pred_region
      _
    $region45: #{tpu_custom_call.1} parent=1 // pred_fallthru
      _
    // Predicated region
    $region46: #{tpu_custom_call.1} parent=1 // pred_check
      _
    $region47: #{tpu_custom_call.1} parent=1 // pred_check_branch
      %64 = sbr.rel (0) target = $region49
    $region48: #{tpu_custom_call.1} parent=1 // pred_region
      _
    $region49: #{tpu_custom_call.1} parent=1 // pred_fallthru
      _
    // Predicated region
    $region50: #{tpu_custom_call.1} parent=1 // pred_check
      _
    $region51: #{tpu_custom_call.1} parent=1 // pred_check_branch
      %66 = sbr.rel (0) target = $region53
    $region52: #{tpu_custom_call.1} parent=1 // pred_region
      _
    $region53: #{tpu_custom_call.1} parent=1 // pred_fallthru
      _
    // Predicated region
    $region54: #{tpu_custom_call.1} parent=1 // pred_check
      _
    $region55: #{tpu_custom_call.1} parent=1 // pred_check_branch
      %68 = sbr.rel (0) target = $region57
    $region56: #{tpu_custom_call.1} parent=1 // pred_region
      %69 = dma.done [#allocation3], 12288
    $region57: #{tpu_custom_call.1} parent=1 // pred_fallthru
      _
    // Predicated region
    $region58: #{tpu_custom_call.1} parent=1 // pred_check
      _
    $region59: #{tpu_custom_call.1} parent=1 // pred_check_branch
      %71 = sbr.rel (0) target = $region61
    $region60: #{tpu_custom_call.1} parent=1 // pred_region
      %72 = dma.done [#allocation6], 12288
    $region61: #{tpu_custom_call.1} parent=1 // pred_fallthru
      _
    %v74 = vld [vmem:[%s0] sm:$0xff]
    %v75 = vld [vmem:[%s0 + $0x8] sm:$0xff]
    %v76 = vld [vmem:[%s0 + $0x10] sm:$0xff]
    %v77 = vld [vmem:[%s0 + $0x18] sm:$0xff]
    %v78 = vld [vmem:[%s0 + $0x20] sm:$0xff]
    %v79 = vld [vmem:[%s0 + $0x28] sm:$0xff]
    %v80 = vld [vmem:[%s0 + $0x30] sm:$0xff]
    %v81 = vld [vmem:[%s0 + $0x38] sm:$0xff]
    %v82 = vpack.c.bf16 %v76, %v74
    %v83 = vpack.c.bf16 %v77, %v75
    %v84 = vpack.c.bf16 %v80, %v78
    %v85 = vpack.c.bf16 %v81, %v79
    %v86 = vld [vmem:[%s1] sm:$0xf]
    %v87 = vld [vmem:[%s1 + $0x4] sm:$0xf]
    %v88 = vld [vmem:[%s1 + $0x8] sm:$0xf]
    %v89 = vld [vmem:[%s1 + $0xc] sm:$0xf]
    %v94 = vunpack.c.l.b16 %v86
    %v95 = vunpack.c.l.b16 %v87
    %v96 = vunpack.c.l.b16 %v88
    %v97 = vunpack.c.l.b16 %v89
    %v98 = vpack.c.b16 %v95, %v94
    %v99 = vpack.c.b16 %v97, %v96
    %vm100 = vcmask 261120
    %v102 = vsel %vm100, %v98, 0
    %v105 = vsel %vm100, %v99, 0
    %107 = vmatprep.subr.bf16.mxu0 %v83
    %108 = vmatpush1.bf16.msra.mxu0 %v82
    %109 = vmatprep.subr.bf16.mxu0 %v85
    %110 = vmatpush1.bf16.msra.mxu0 %v84
    %111 = vmatprep.subr.bf16.mxu0 0
    %112 = vmatpush1.bf16.msra.mxu0 0
    %113 = vmatprep.subr.bf16.mxu0 0
    %114 = vmatpush1.bf16.msra.mxu0 0
    %115 = vmatprep.subr.bf16.mxu0 0
    %116 = vmatpush1.bf16.msra.mxu0 0
    %117 = vmatprep.subr.bf16.mxu0 0
    %118 = vmatpush1.bf16.msra.mxu0 0
    %119 = vmatprep.subr.bf16.mxu0 0
    %120 = vmatpush1.bf16.msra.mxu0 0
    %121 = vmatprep.subr.bf16.mxu0 0
    %122 = vmatpush1.bf16.msra.mxu0 0
    %123 = vmatprep.subr.bf16.mxu0 0
    %124 = vmatpush1.bf16.msra.mxu0 0
    %125 = vmatprep.subr.bf16.mxu0 0
    %126 = vmatpush1.bf16.msra.mxu0 0
    %127 = vmatprep.subr.bf16.mxu0 0
    %128 = vmatpush1.bf16.msra.mxu0 0
    %129 = vmatprep.subr.bf16.mxu0 0
    %130 = vmatpush1.bf16.msra.mxu0 0
    %131 = vmatprep.subr.bf16.mxu0 0
    %132 = vmatpush1.bf16.msra.mxu0 0
    %133 = vmatprep.subr.bf16.mxu0 0
    %134 = vmatpush1.bf16.msra.mxu0 0
    %135 = vmatprep.subr.bf16.mxu0 0
    %136 = vmatpush1.bf16.msra.mxu0 0
    %137 = vmatprep.subr.bf16.mxu0 0
    %138 = vmatpush1.bf16.msra.mxu0 0
    %139 = vmatprep.mubr.bf16.mxu0 0
    %140 = vmatmul.mubr.bf16.gmra.mrb[0].mxu0 %v102
    %v141 = vpop.f32.mrb[0].mxu0
    %v142 = vadd.f32 0.0, %v141
    %v143 = vpop.f32.mrb[0].mxu0
    %v144 = vadd.f32 0.0, %v143
    %v145 = vpop.f32.mrb[0].mxu0
    %v146 = vadd.f32 0.0, %v145
    %v147 = vpop.f32.mrb[0].mxu0
    %v148 = vadd.f32 0.0, %v147
    %149 = vmatprep.mubr.bf16.mxu0 0
    %150 = vmatmul.mubr.bf16.gmra.mrb[0].mxu0 %v105
    %v151 = vpop.f32.mrb[0].mxu0
    %v152 = vadd.f32 0.0, %v151
    %v153 = vpop.f32.mrb[0].mxu0
    %v154 = vadd.f32 0.0, %v153
    %v155 = vpop.f32.mrb[0].mxu0
    %v156 = vadd.f32 0.0, %v155
    %v157 = vpop.f32.mrb[0].mxu0
    %v158 = vadd.f32 0.0, %v157
    %159 = vdwg.mxu0
    %v160 = vpack.c.bf16 %v146, %v142
    %v161 = vpack.c.bf16 %v148, %v144
    %v162 = vpack.c.bf16 %v156, %v152
    %v163 = vpack.c.bf16 %v158, %v154
    %v164 = vld [vmem:[%s2] sm:$0xf]
    %v165 = vld [vmem:[%s2 + $0x4] sm:$0xf]
    %v166 = vld [vmem:[%s2 + $0x8] sm:$0xf]
    %v167 = vld [vmem:[%s2 + $0xc] sm:$0xf]
    %v172 = vunpack.c.l.b16 %v164
    %v173 = vunpack.c.l.b16 %v165
    %v174 = vunpack.c.l.b16 %v166
    %v175 = vunpack.c.l.b16 %v167
    %v176 = vpack.c.b16 %v173, %v172
    %v177 = vpack.c.b16 %v175, %v174
    %v179 = vsel %vm100, %v176, 0
    %v182 = vsel %vm100, %v177, 0
    %184 = vmatprep.subr.bf16.mxu0 %v83
    %185 = vmatpush1.bf16.msra.mxu0 %v82
    %186 = vmatprep.subr.bf16.mxu0 %v85
    %187 = vmatpush1.bf16.msra.mxu0 %v84
    %188 = vmatprep.subr.bf16.mxu0 0
    %189 = vmatpush1.bf16.msra.mxu0 0
    %190 = vmatprep.subr.bf16.mxu0 0
    %191 = vmatpush1.bf16.msra.mxu0 0
    %192 = vmatprep.subr.bf16.mxu0 0
    %193 = vmatpush1.bf16.msra.mxu0 0
    %194 = vmatprep.subr.bf16.mxu0 0
    %195 = vmatpush1.bf16.msra.mxu0 0
    %196 = vmatprep.subr.bf16.mxu0 0
    %197 = vmatpush1.bf16.msra.mxu0 0
    %198 = vmatprep.subr.bf16.mxu0 0
    %199 = vmatpush1.bf16.msra.mxu0 0
    %200 = vmatprep.subr.bf16.mxu0 0
    %201 = vmatpush1.bf16.msra.mxu0 0
    %202 = vmatprep.subr.bf16.mxu0 0
    %203 = vmatpush1.bf16.msra.mxu0 0
    %204 = vmatprep.subr.bf16.mxu0 0
    %205 = vmatpush1.bf16.msra.mxu0 0
    %206 = vmatprep.subr.bf16.mxu0 0
    %207 = vmatpush1.bf16.msra.mxu0 0
    %208 = vmatprep.subr.bf16.mxu0 0
    %209 = vmatpush1.bf16.msra.mxu0 0
    %210 = vmatprep.subr.bf16.mxu0 0
    %211 = vmatpush1.bf16.msra.mxu0 0
    %212 = vmatprep.subr.bf16.mxu0 0
    %213 = vmatpush1.bf16.msra.mxu0 0
    %214 = vmatprep.subr.bf16.mxu0 0
    %215 = vmatpush1.bf16.msra.mxu0 0
    %216 = vmatprep.mubr.bf16.mxu0 0
    %217 = vmatmul.mubr.bf16.gmra.mrb[0].mxu0 %v179
    %v218 = vpop.f32.mrb[0].mxu0
    %v219 = vadd.f32 0.0, %v218
    %v220 = vpop.f32.mrb[0].mxu0
    %v221 = vadd.f32 0.0, %v220
    %v222 = vpop.f32.mrb[0].mxu0
    %v223 = vadd.f32 0.0, %v222
    %v224 = vpop.f32.mrb[0].mxu0
    %v225 = vadd.f32 0.0, %v224
    %226 = vmatprep.mubr.bf16.mxu0 0
    %227 = vmatmul.mubr.bf16.gmra.mrb[0].mxu0 %v182
    %v228 = vpop.f32.mrb[0].mxu0
    %v229 = vadd.f32 0.0, %v228
    %v230 = vpop.f32.mrb[0].mxu0
    %v231 = vadd.f32 0.0, %v230
    %v232 = vpop.f32.mrb[0].mxu0
    %v233 = vadd.f32 0.0, %v232
    %v234 = vpop.f32.mrb[0].mxu0
    %v235 = vadd.f32 0.0, %v234
    %236 = vdwg.mxu0
    %v237 = vpack.c.bf16 %v223, %v219
    %v238 = vpack.c.bf16 %v225, %v221
    %v239 = vpack.c.bf16 %v233, %v229
    %v240 = vpack.c.bf16 %v235, %v231
    %v241 = vld [vmem:[#allocation2] sm:$0xff]
    %v242 = vld [vmem:[#allocation2 + $0x8] sm:$0xff]
    %v243 = vld [vmem:[#allocation2 + $0x10] sm:$0xff]
    %v244 = vld [vmem:[#allocation2 + $0x18] sm:$0xff]
    %v245 = vld [vmem:[#allocation2 + $0x20] sm:$0xff]
    %v246 = vld [vmem:[#allocation2 + $0x28] sm:$0xff]
    %v247 = vld [vmem:[#allocation2 + $0x30] sm:$0xff]
    %v248 = vld [vmem:[#allocation2 + $0x38] sm:$0xff]
    %v249 = vld [vmem:[#allocation2 + $0x40] sm:$0xff]
    %v250 = vld [vmem:[#allocation2 + $0x48] sm:$0xff]
    %v251 = vld [vmem:[#allocation2 + $0x50] sm:$0xff]
    %v252 = vld [vmem:[#allocation2 + $0x58] sm:$0xff]
    %v253 = vld [vmem:[#allocation2 + $0x60] sm:$0xff]
    %v254 = vld [vmem:[#allocation2 + $0x68] sm:$0xff]
    %v255 = vld [vmem:[#allocation2 + $0x70] sm:$0xff]
    %v256 = vld [vmem:[#allocation2 + $0x78] sm:$0xff]
    %v257 = vld [vmem:[#allocation2 + $0x80] sm:$0xff]
    %v258 = vld [vmem:[#allocation2 + $0x88] sm:$0xff]
    %v259 = vld [vmem:[#allocation2 + $0x90] sm:$0xff]
    %v260 = vld [vmem:[#allocation2 + $0x98] sm:$0xff]
    %v261 = vld [vmem:[#allocation2 + $0xa0] sm:$0xff]
    %v262 = vld [vmem:[#allocation2 + $0xa8] sm:$0xff]
    %v263 = vld [vmem:[#allocation2 + $0xb0] sm:$0xff]
    %v264 = vld [vmem:[#allocation2 + $0xb8] sm:$0xff]
    %v265 = vld [vmem:[#allocation2 + $0xc0] sm:$0xff]
    %v266 = vld [vmem:[#allocation2 + $0xc8] sm:$0xff]
    %v267 = vld [vmem:[#allocation2 + $0xd0] sm:$0xff]
    %v268 = vld [vmem:[#allocation2 + $0xd8] sm:$0xff]
    %v269 = vld [vmem:[#allocation2 + $0xe0] sm:$0xff]
    %v270 = vld [vmem:[#allocation2 + $0xe8] sm:$0xff]
    %v271 = vld [vmem:[#allocation2 + $0xf0] sm:$0xff]
    %v272 = vld [vmem:[#allocation2 + $0xf8] sm:$0xff]
    %s273 = scalar_lea.vmem [#allocation2], 256
    %v274 = vld [vmem:[%s273] sm:$0xff]
    %v275 = vld [vmem:[%s273 + $0x8] sm:$0xff]
    %v276 = vld [vmem:[%s273 + $0x10] sm:$0xff]
    %v277 = vld [vmem:[%s273 + $0x18] sm:$0xff]
    %v278 = vld [vmem:[%s273 + $0x20] sm:$0xff]
    %v279 = vld [vmem:[%s273 + $0x28] sm:$0xff]
    %v280 = vld [vmem:[%s273 + $0x30] sm:$0xff]
    %v281 = vld [vmem:[%s273 + $0x38] sm:$0xff]
    %v282 = vld [vmem:[%s273 + $0x40] sm:$0xff]
    %v283 = vld [vmem:[%s273 + $0x48] sm:$0xff]
    %v284 = vld [vmem:[%s273 + $0x50] sm:$0xff]
    %v285 = vld [vmem:[%s273 + $0x58] sm:$0xff]
    %v286 = vld [vmem:[%s273 + $0x60] sm:$0xff]
    %v287 = vld [vmem:[%s273 + $0x68] sm:$0xff]
    %v288 = vld [vmem:[%s273 + $0x70] sm:$0xff]
    %v289 = vld [vmem:[%s273 + $0x78] sm:$0xff]
    %v290 = vld [vmem:[%s273 + $0x80] sm:$0xff]
    %v291 = vld [vmem:[%s273 + $0x88] sm:$0xff]
    %v292 = vld [vmem:[%s273 + $0x90] sm:$0xff]
    %v293 = vld [vmem:[%s273 + $0x98] sm:$0xff]
    %v294 = vld [vmem:[%s273 + $0xa0] sm:$0xff]
    %v295 = vld [vmem:[%s273 + $0xa8] sm:$0xff]
    %v296 = vld [vmem:[%s273 + $0xb0] sm:$0xff]
    %v297 = vld [vmem:[%s273 + $0xb8] sm:$0xff]
    %v298 = vld [vmem:[%s273 + $0xc0] sm:$0xff]
    %v299 = vld [vmem:[%s273 + $0xc8] sm:$0xff]
    %v300 = vld [vmem:[%s273 + $0xd0] sm:$0xff]
    %v301 = vld [vmem:[%s273 + $0xd8] sm:$0xff]
    %v302 = vld [vmem:[%s273 + $0xe0] sm:$0xff]
    %v303 = vld [vmem:[%s273 + $0xe8] sm:$0xff]
    %v304 = vld [vmem:[%s273 + $0xf0] sm:$0xff]
    %v305 = vld [vmem:[%s273 + $0xf8] sm:$0xff]
    %v338 = vunpack.c.l.b16 %v274
    %v339 = vunpack.c.h.b16 %v274
    %v340 = vunpack.c.l.b16 %v275
    %v341 = vunpack.c.h.b16 %v275
    %v342 = vunpack.c.l.b16 %v276
    %v343 = vunpack.c.h.b16 %v276
    %v344 = vunpack.c.l.b16 %v277
    %v345 = vunpack.c.h.b16 %v277
    %v346 = vunpack.c.l.b16 %v278
    %v347 = vunpack.c.h.b16 %v278
    %v348 = vunpack.c.l.b16 %v279
    %v349 = vunpack.c.h.b16 %v279
    %v350 = vunpack.c.l.b16 %v280
    %v351 = vunpack.c.h.b16 %v280
    %v352 = vunpack.c.l.b16 %v281
    %v353 = vunpack.c.h.b16 %v281
    %v354 = vunpack.c.l.b16 %v282
    %v355 = vunpack.c.h.b16 %v282
    %v356 = vunpack.c.l.b16 %v283
    %v357 = vunpack.c.h.b16 %v283
    %v358 = vunpack.c.l.b16 %v284
    %v359 = vunpack.c.h.b16 %v284
    %v360 = vunpack.c.l.b16 %v285
    %v361 = vunpack.c.h.b16 %v285
    %v362 = vunpack.c.l.b16 %v286
    %v363 = vunpack.c.h.b16 %v286
    %v364 = vunpack.c.l.b16 %v287
    %v365 = vunpack.c.h.b16 %v287
    %v366 = vunpack.c.l.b16 %v288
    %v367 = vunpack.c.h.b16 %v288
    %v368 = vunpack.c.l.b16 %v289
    %v369 = vunpack.c.h.b16 %v289
    %v370 = vunpack.c.l.b16 %v290
    %v371 = vunpack.c.h.b16 %v290
    %v372 = vunpack.c.l.b16 %v291
    %v373 = vunpack.c.h.b16 %v291
    %v374 = vunpack.c.l.b16 %v292
    %v375 = vunpack.c.h.b16 %v292
    %v376 = vunpack.c.l.b16 %v293
    %v377 = vunpack.c.h.b16 %v293
    %v378 = vunpack.c.l.b16 %v294
    %v379 = vunpack.c.h.b16 %v294
    %v380 = vunpack.c.l.b16 %v295
    %v381 = vunpack.c.h.b16 %v295
    %v382 = vunpack.c.l.b16 %v296
    %v383 = vunpack.c.h.b16 %v296
    %v384 = vunpack.c.l.b16 %v297
    %v385 = vunpack.c.h.b16 %v297
    %v386 = vunpack.c.l.b16 %v298
    %v387 = vunpack.c.h.b16 %v298
    %v388 = vunpack.c.l.b16 %v299
    %v389 = vunpack.c.h.b16 %v299
    %v390 = vunpack.c.l.b16 %v300
    %v391 = vunpack.c.h.b16 %v300
    %v392 = vunpack.c.l.b16 %v301
    %v393 = vunpack.c.h.b16 %v301
    %v394 = vunpack.c.l.b16 %v302
    %v395 = vunpack.c.h.b16 %v302
    %v396 = vunpack.c.l.b16 %v303
    %v397 = vunpack.c.h.b16 %v303
    %v398 = vunpack.c.l.b16 %v304
    %v399 = vunpack.c.h.b16 %v304
    %v400 = vunpack.c.l.b16 %v305
    %v401 = vunpack.c.h.b16 %v305
    %v402 = vpack.c.b16 %v340, %v338
    %v403 = vpack.c.b16 %v341, %v339
    %v404 = vpack.c.b16 %v344, %v342
    %v405 = vpack.c.b16 %v345, %v343
    %v406 = vpack.c.b16 %v348, %v346
    %v407 = vpack.c.b16 %v349, %v347
    %v408 = vpack.c.b16 %v352, %v350
    %v409 = vpack.c.b16 %v353, %v351
    %v410 = vpack.c.b16 %v356, %v354
    %v411 = vpack.c.b16 %v357, %v355
    %v412 = vpack.c.b16 %v360, %v358
    %v413 = vpack.c.b16 %v361, %v359
    %v414 = vpack.c.b16 %v364, %v362
    %v415 = vpack.c.b16 %v365, %v363
    %v416 = vpack.c.b16 %v368, %v366
    %v417 = vpack.c.b16 %v369, %v367
    %v418 = vpack.c.b16 %v372, %v370
    %v419 = vpack.c.b16 %v373, %v371
    %v420 = vpack.c.b16 %v376, %v374
    %v421 = vpack.c.b16 %v377, %v375
    %v422 = vpack.c.b16 %v380, %v378
    %v423 = vpack.c.b16 %v381, %v379
    %v424 = vpack.c.b16 %v384, %v382
    %v425 = vpack.c.b16 %v385, %v383
    %v426 = vpack.c.b16 %v388, %v386
    %v427 = vpack.c.b16 %v389, %v387
    %v428 = vpack.c.b16 %v392, %v390
    %v429 = vpack.c.b16 %v393, %v391
    %v430 = vpack.c.b16 %v396, %v394
    %v431 = vpack.c.b16 %v397, %v395
    %v432 = vpack.c.b16 %v400, %v398
    %v433 = vpack.c.b16 %v401, %v399
    %466 = vmatprep.subr.bf16.mxu0 %v403
    %467 = vmatpush1.bf16.msra.mxu0 %v402
    %468 = vmatprep.subr.bf16.mxu0 %v405
    %469 = vmatpush1.bf16.msra.mxu0 %v404
    %470 = vmatprep.subr.bf16.mxu0 %v407
    %471 = vmatpush1.bf16.msra.mxu0 %v406
    %472 = vmatprep.subr.bf16.mxu0 %v409
    %473 = vmatpush1.bf16.msra.mxu0 %v408
    %474 = vmatprep.subr.bf16.mxu0 %v411
    %475 = vmatpush1.bf16.msra.mxu0 %v410
    %476 = vmatprep.subr.bf16.mxu0 %v413
    %477 = vmatpush1.bf16.msra.mxu0 %v412
    %478 = vmatprep.subr.bf16.mxu0 %v415
    %479 = vmatpush1.bf16.msra.mxu0 %v414
    %480 = vmatprep.subr.bf16.mxu0 %v417
    %481 = vmatpush1.bf16.msra.mxu0 %v416
    %482 = vmatprep.subr.bf16.mxu0 %v419
    %483 = vmatpush1.bf16.msra.mxu0 %v418
    %484 = vmatprep.subr.bf16.mxu0 %v421
    %485 = vmatpush1.bf16.msra.mxu0 %v420
    %486 = vmatprep.subr.bf16.mxu0 %v423
    %487 = vmatpush1.bf16.msra.mxu0 %v422
    %488 = vmatprep.subr.bf16.mxu0 %v425
    %489 = vmatpush1.bf16.msra.mxu0 %v424
    %490 = vmatprep.subr.bf16.mxu0 %v427
    %491 = vmatpush1.bf16.msra.mxu0 %v426
    %492 = vmatprep.subr.bf16.mxu0 %v429
    %493 = vmatpush1.bf16.msra.mxu0 %v428
    %494 = vmatprep.subr.bf16.mxu0 %v431
    %495 = vmatpush1.bf16.msra.mxu0 %v430
    %496 = vmatprep.subr.bf16.mxu0 %v433
    %497 = vmatpush1.bf16.msra.mxu0 %v432
    %498 = vmatprep.mubr.bf16.mxu0 %v83
    %499 = vmatmul.mubr.bf16.gmra.mrb[0].mxu0 %v82
    %v500 = vpop.f32.mrb[0].mxu0
    %v501 = vadd.f32 0.0, %v500
    %v502 = vpop.f32.mrb[0].mxu0
    %v503 = vadd.f32 0.0, %v502
    %v504 = vpop.f32.mrb[0].mxu0
    %v505 = vadd.f32 0.0, %v504
    %v506 = vpop.f32.mrb[0].mxu0
    %v507 = vadd.f32 0.0, %v506
    %508 = vmatprep.mubr.bf16.mxu0 %v85
    %509 = vmatmul.mubr.bf16.gmra.mrb[0].mxu0 %v84
    %v510 = vpop.f32.mrb[0].mxu0
    %v511 = vadd.f32 0.0, %v510
    %v512 = vpop.f32.mrb[0].mxu0
    %v513 = vadd.f32 0.0, %v512
    %v514 = vpop.f32.mrb[0].mxu0
    %v515 = vadd.f32 0.0, %v514
    %v516 = vpop.f32.mrb[0].mxu0
    %v517 = vadd.f32 0.0, %v516
    %518 = vdwg.mxu0
    %v551 = vunpack.c.l.b16 %v241
    %v552 = vunpack.c.h.b16 %v241
    %v553 = vunpack.c.l.b16 %v242
    %v554 = vunpack.c.h.b16 %v242
    %v555 = vunpack.c.l.b16 %v243
    %v556 = vunpack.c.h.b16 %v243
    %v557 = vunpack.c.l.b16 %v244
    %v558 = vunpack.c.h.b16 %v244
    %v559 = vunpack.c.l.b16 %v245
    %v560 = vunpack.c.h.b16 %v245
    %v561 = vunpack.c.l.b16 %v246
    %v562 = vunpack.c.h.b16 %v246
    %v563 = vunpack.c.l.b16 %v247
    %v564 = vunpack.c.h.b16 %v247
    %v565 = vunpack.c.l.b16 %v248
    %v566 = vunpack.c.h.b16 %v248
    %v567 = vunpack.c.l.b16 %v249
    %v568 = vunpack.c.h.b16 %v249
    %v569 = vunpack.c.l.b16 %v250
    %v570 = vunpack.c.h.b16 %v250
    %v571 = vunpack.c.l.b16 %v251
    %v572 = vunpack.c.h.b16 %v251
    %v573 = vunpack.c.l.b16 %v252
    %v574 = vunpack.c.h.b16 %v252
    %v575 = vunpack.c.l.b16 %v253
    %v576 = vunpack.c.h.b16 %v253
    %v577 = vunpack.c.l.b16 %v254
    %v578 = vunpack.c.h.b16 %v254
    %v579 = vunpack.c.l.b16 %v255
    %v580 = vunpack.c.h.b16 %v255
    %v581 = vunpack.c.l.b16 %v256
    %v582 = vunpack.c.h.b16 %v256
    %v583 = vunpack.c.l.b16 %v257
    %v584 = vunpack.c.h.b16 %v257
    %v585 = vunpack.c.l.b16 %v258
    %v586 = vunpack.c.h.b16 %v258
    %v587 = vunpack.c.l.b16 %v259
    %v588 = vunpack.c.h.b16 %v259
    %v589 = vunpack.c.l.b16 %v260
    %v590 = vunpack.c.h.b16 %v260
    %v591 = vunpack.c.l.b16 %v261
    %v592 = vunpack.c.h.b16 %v261
    %v593 = vunpack.c.l.b16 %v262
    %v594 = vunpack.c.h.b16 %v262
    %v595 = vunpack.c.l.b16 %v263
    %v596 = vunpack.c.h.b16 %v263
    %v597 = vunpack.c.l.b16 %v264
    %v598 = vunpack.c.h.b16 %v264
    %v599 = vunpack.c.l.b16 %v265
    %v600 = vunpack.c.h.b16 %v265
    %v601 = vunpack.c.l.b16 %v266
    %v602 = vunpack.c.h.b16 %v266
    %v603 = vunpack.c.l.b16 %v267
    %v604 = vunpack.c.h.b16 %v267
    %v605 = vunpack.c.l.b16 %v268
    %v606 = vunpack.c.h.b16 %v268
    %v607 = vunpack.c.l.b16 %v269
    %v608 = vunpack.c.h.b16 %v269
    %v609 = vunpack.c.l.b16 %v270
    %v610 = vunpack.c.h.b16 %v270
    %v611 = vunpack.c.l.b16 %v271
    %v612 = vunpack.c.h.b16 %v271
    %v613 = vunpack.c.l.b16 %v272
    %v614 = vunpack.c.h.b16 %v272
    %v615 = vpack.c.b16 %v553, %v551
    %v616 = vpack.c.b16 %v554, %v552
    %v617 = vpack.c.b16 %v557, %v555
    %v618 = vpack.c.b16 %v558, %v556
    %v619 = vpack.c.b16 %v561, %v559
    %v620 = vpack.c.b16 %v562, %v560
    %v621 = vpack.c.b16 %v565, %v563
    %v622 = vpack.c.b16 %v566, %v564
    %v623 = vpack.c.b16 %v569, %v567
    %v624 = vpack.c.b16 %v570, %v568
    %v625 = vpack.c.b16 %v573, %v571
    %v626 = vpack.c.b16 %v574, %v572
    %v627 = vpack.c.b16 %v577, %v575
    %v628 = vpack.c.b16 %v578, %v576
    %v629 = vpack.c.b16 %v581, %v579
    %v630 = vpack.c.b16 %v582, %v580
    %v631 = vpack.c.b16 %v585, %v583
    %v632 = vpack.c.b16 %v586, %v584
    %v633 = vpack.c.b16 %v589, %v587
    %v634 = vpack.c.b16 %v590, %v588
    %v635 = vpack.c.b16 %v593, %v591
    %v636 = vpack.c.b16 %v594, %v592
    %v637 = vpack.c.b16 %v597, %v595
    %v638 = vpack.c.b16 %v598, %v596
    %v639 = vpack.c.b16 %v601, %v599
    %v640 = vpack.c.b16 %v602, %v600
    %v641 = vpack.c.b16 %v605, %v603
    %v642 = vpack.c.b16 %v606, %v604
    %v643 = vpack.c.b16 %v609, %v607
    %v644 = vpack.c.b16 %v610, %v608
    %v645 = vpack.c.b16 %v613, %v611
    %v646 = vpack.c.b16 %v614, %v612
    %679 = vmatprep.subr.bf16.mxu0 %v616
    %680 = vmatpush1.bf16.msra.mxu0 %v615
    %681 = vmatprep.subr.bf16.mxu0 %v618
    %682 = vmatpush1.bf16.msra.mxu0 %v617
    %683 = vmatprep.subr.bf16.mxu0 %v620
    %684 = vmatpush1.bf16.msra.mxu0 %v619
    %685 = vmatprep.subr.bf16.mxu0 %v622
    %686 = vmatpush1.bf16.msra.mxu0 %v621
    %687 = vmatprep.subr.bf16.mxu0 %v624
    %688 = vmatpush1.bf16.msra.mxu0 %v623
    %689 = vmatprep.subr.bf16.mxu0 %v626
    %690 = vmatpush1.bf16.msra.mxu0 %v625
    %691 = vmatprep.subr.bf16.mxu0 %v628
    %692 = vmatpush1.bf16.msra.mxu0 %v627
    %693 = vmatprep.subr.bf16.mxu0 %v630
    %694 = vmatpush1.bf16.msra.mxu0 %v629
    %695 = vmatprep.subr.bf16.mxu0 %v632
    %696 = vmatpush1.bf16.msra.mxu0 %v631
    %697 = vmatprep.subr.bf16.mxu0 %v634
    %698 = vmatpush1.bf16.msra.mxu0 %v633
    %699 = vmatprep.subr.bf16.mxu0 %v636
    %700 = vmatpush1.bf16.msra.mxu0 %v635
    %701 = vmatprep.subr.bf16.mxu0 %v638
    %702 = vmatpush1.bf16.msra.mxu0 %v637
    %703 = vmatprep.subr.bf16.mxu0 %v640
    %704 = vmatpush1.bf16.msra.mxu0 %v639
    %705 = vmatprep.subr.bf16.mxu0 %v642
    %706 = vmatpush1.bf16.msra.mxu0 %v641
    %707 = vmatprep.subr.bf16.mxu0 %v644
    %708 = vmatpush1.bf16.msra.mxu0 %v643
    %709 = vmatprep.subr.bf16.mxu0 %v646
    %710 = vmatpush1.bf16.msra.mxu0 %v645
    %711 = vmatprep.mubr.bf16.mxu0 %v161
    %712 = vmatmul.mubr.bf16.gmra.mrb[0].mxu0 %v160
    %v713 = vpop.f32.mrb[0].mxu0
    %v714 = vadd.f32 %v501, %v713
    %v715 = vpop.f32.mrb[0].mxu0
    %v716 = vadd.f32 %v503, %v715
    %v717 = vpop.f32.mrb[0].mxu0
    %v718 = vadd.f32 %v505, %v717
    %v719 = vpop.f32.mrb[0].mxu0
    %v720 = vadd.f32 %v507, %v719
    %721 = vmatprep.mubr.bf16.mxu0 %v163
    %722 = vmatmul.mubr.bf16.gmra.mrb[0].mxu0 %v162
    %v723 = vpop.f32.mrb[0].mxu0
    %v724 = vadd.f32 %v511, %v723
    %v725 = vpop.f32.mrb[0].mxu0
    %v726 = vadd.f32 %v513, %v725
    %v727 = vpop.f32.mrb[0].mxu0
    %v728 = vadd.f32 %v515, %v727
    %v729 = vpop.f32.mrb[0].mxu0
    %v730 = vadd.f32 %v517, %v729
    %731 = vdwg.mxu0
    %s732 = scalar_lea.vmem [#allocation2], 512
    %v733 = vld [vmem:[%s732] sm:$0xff]
    %v734 = vld [vmem:[%s732 + $0x8] sm:$0xff]
    %v735 = vld [vmem:[%s732 + $0x10] sm:$0xff]
    %v736 = vld [vmem:[%s732 + $0x18] sm:$0xff]
    %v737 = vld [vmem:[%s732 + $0x20] sm:$0xff]
    %v738 = vld [vmem:[%s732 + $0x28] sm:$0xff]
    %v739 = vld [vmem:[%s732 + $0x30] sm:$0xff]
    %v740 = vld [vmem:[%s732 + $0x38] sm:$0xff]
    %v741 = vld [vmem:[%s732 + $0x40] sm:$0xff]
    %v742 = vld [vmem:[%s732 + $0x48] sm:$0xff]
    %v743 = vld [vmem:[%s732 + $0x50] sm:$0xff]
    %v744 = vld [vmem:[%s732 + $0x58] sm:$0xff]
    %v745 = vld [vmem:[%s732 + $0x60] sm:$0xff]
    %v746 = vld [vmem:[%s732 + $0x68] sm:$0xff]
    %v747 = vld [vmem:[%s732 + $0x70] sm:$0xff]
    %v748 = vld [vmem:[%s732 + $0x78] sm:$0xff]
    %v749 = vld [vmem:[%s732 + $0x80] sm:$0xff]
    %v750 = vld [vmem:[%s732 + $0x88] sm:$0xff]
    %v751 = vld [vmem:[%s732 + $0x90] sm:$0xff]
    %v752 = vld [vmem:[%s732 + $0x98] sm:$0xff]
    %v753 = vld [vmem:[%s732 + $0xa0] sm:$0xff]
    %v754 = vld [vmem:[%s732 + $0xa8] sm:$0xff]
    %v755 = vld [vmem:[%s732 + $0xb0] sm:$0xff]
    %v756 = vld [vmem:[%s732 + $0xb8] sm:$0xff]
    %v757 = vld [vmem:[%s732 + $0xc0] sm:$0xff]
    %v758 = vld [vmem:[%s732 + $0xc8] sm:$0xff]
    %v759 = vld [vmem:[%s732 + $0xd0] sm:$0xff]
    %v760 = vld [vmem:[%s732 + $0xd8] sm:$0xff]
    %v761 = vld [vmem:[%s732 + $0xe0] sm:$0xff]
    %v762 = vld [vmem:[%s732 + $0xe8] sm:$0xff]
    %v763 = vld [vmem:[%s732 + $0xf0] sm:$0xff]
    %v764 = vld [vmem:[%s732 + $0xf8] sm:$0xff]
    %v797 = vunpack.c.l.b16 %v733
    %v798 = vunpack.c.h.b16 %v733
    %v799 = vunpack.c.l.b16 %v734
    %v800 = vunpack.c.h.b16 %v734
    %v801 = vunpack.c.l.b16 %v735
    %v802 = vunpack.c.h.b16 %v735
    %v803 = vunpack.c.l.b16 %v736
    %v804 = vunpack.c.h.b16 %v736
    %v805 = vunpack.c.l.b16 %v737
    %v806 = vunpack.c.h.b16 %v737
    %v807 = vunpack.c.l.b16 %v738
    %v808 = vunpack.c.h.b16 %v738
    %v809 = vunpack.c.l.b16 %v739
    %v810 = vunpack.c.h.b16 %v739
    %v811 = vunpack.c.l.b16 %v740
    %v812 = vunpack.c.h.b16 %v740
    %v813 = vunpack.c.l.b16 %v741
    %v814 = vunpack.c.h.b16 %v741
    %v815 = vunpack.c.l.b16 %v742
    %v816 = vunpack.c.h.b16 %v742
    %v817 = vunpack.c.l.b16 %v743
    %v818 = vunpack.c.h.b16 %v743
    %v819 = vunpack.c.l.b16 %v744
    %v820 = vunpack.c.h.b16 %v744
    %v821 = vunpack.c.l.b16 %v745
    %v822 = vunpack.c.h.b16 %v745
    %v823 = vunpack.c.l.b16 %v746
    %v824 = vunpack.c.h.b16 %v746
    %v825 = vunpack.c.l.b16 %v747
    %v826 = vunpack.c.h.b16 %v747
    %v827 = vunpack.c.l.b16 %v748
    %v828 = vunpack.c.h.b16 %v748
    %v829 = vunpack.c.l.b16 %v749
    %v830 = vunpack.c.h.b16 %v749
    %v831 = vunpack.c.l.b16 %v750
    %v832 = vunpack.c.h.b16 %v750
    %v833 = vunpack.c.l.b16 %v751
    %v834 = vunpack.c.h.b16 %v751
    %v835 = vunpack.c.l.b16 %v752
    %v836 = vunpack.c.h.b16 %v752
    %v837 = vunpack.c.l.b16 %v753
    %v838 = vunpack.c.h.b16 %v753
    %v839 = vunpack.c.l.b16 %v754
    %v840 = vunpack.c.h.b16 %v754
    %v841 = vunpack.c.l.b16 %v755
    %v842 = vunpack.c.h.b16 %v755
    %v843 = vunpack.c.l.b16 %v756
    %v844 = vunpack.c.h.b16 %v756
    %v845 = vunpack.c.l.b16 %v757
    %v846 = vunpack.c.h.b16 %v757
    %v847 = vunpack.c.l.b16 %v758
    %v848 = vunpack.c.h.b16 %v758
    %v849 = vunpack.c.l.b16 %v759
    %v850 = vunpack.c.h.b16 %v759
    %v851 = vunpack.c.l.b16 %v760
    %v852 = vunpack.c.h.b16 %v760
    %v853 = vunpack.c.l.b16 %v761
    %v854 = vunpack.c.h.b16 %v761
    %v855 = vunpack.c.l.b16 %v762
    %v856 = vunpack.c.h.b16 %v762
    %v857 = vunpack.c.l.b16 %v763
    %v858 = vunpack.c.h.b16 %v763
    %v859 = vunpack.c.l.b16 %v764
    %v860 = vunpack.c.h.b16 %v764
    %v861 = vpack.c.b16 %v799, %v797
    %v862 = vpack.c.b16 %v800, %v798
    %v863 = vpack.c.b16 %v803, %v801
    %v864 = vpack.c.b16 %v804, %v802
    %v865 = vpack.c.b16 %v807, %v805
    %v866 = vpack.c.b16 %v808, %v806
    %v867 = vpack.c.b16 %v811, %v809
    %v868 = vpack.c.b16 %v812, %v810
    %v869 = vpack.c.b16 %v815, %v813
    %v870 = vpack.c.b16 %v816, %v814
    %v871 = vpack.c.b16 %v819, %v817
    %v872 = vpack.c.b16 %v820, %v818
    %v873 = vpack.c.b16 %v823, %v821
    %v874 = vpack.c.b16 %v824, %v822
    %v875 = vpack.c.b16 %v827, %v825
    %v876 = vpack.c.b16 %v828, %v826
    %v877 = vpack.c.b16 %v831, %v829
    %v878 = vpack.c.b16 %v832, %v830
    %v879 = vpack.c.b16 %v835, %v833
    %v880 = vpack.c.b16 %v836, %v834
    %v881 = vpack.c.b16 %v839, %v837
    %v882 = vpack.c.b16 %v840, %v838
    %v883 = vpack.c.b16 %v843, %v841
    %v884 = vpack.c.b16 %v844, %v842
    %v885 = vpack.c.b16 %v847, %v845
    %v886 = vpack.c.b16 %v848, %v846
    %v887 = vpack.c.b16 %v851, %v849
    %v888 = vpack.c.b16 %v852, %v850
    %v889 = vpack.c.b16 %v855, %v853
    %v890 = vpack.c.b16 %v856, %v854
    %v891 = vpack.c.b16 %v859, %v857
    %v892 = vpack.c.b16 %v860, %v858
    %925 = vmatprep.subr.bf16.mxu0 %v862
    %926 = vmatpush1.bf16.msra.mxu0 %v861
    %927 = vmatprep.subr.bf16.mxu0 %v864
    %928 = vmatpush1.bf16.msra.mxu0 %v863
    %929 = vmatprep.subr.bf16.mxu0 %v866
    %930 = vmatpush1.bf16.msra.mxu0 %v865
    %931 = vmatprep.subr.bf16.mxu0 %v868
    %932 = vmatpush1.bf16.msra.mxu0 %v867
    %933 = vmatprep.subr.bf16.mxu0 %v870
    %934 = vmatpush1.bf16.msra.mxu0 %v869
    %935 = vmatprep.subr.bf16.mxu0 %v872
    %936 = vmatpush1.bf16.msra.mxu0 %v871
    %937 = vmatprep.subr.bf16.mxu0 %v874
    %938 = vmatpush1.bf16.msra.mxu0 %v873
    %939 = vmatprep.subr.bf16.mxu0 %v876
    %940 = vmatpush1.bf16.msra.mxu0 %v875
    %941 = vmatprep.subr.bf16.mxu0 %v878
    %942 = vmatpush1.bf16.msra.mxu0 %v877
    %943 = vmatprep.subr.bf16.mxu0 %v880
    %944 = vmatpush1.bf16.msra.mxu0 %v879
    %945 = vmatprep.subr.bf16.mxu0 %v882
    %946 = vmatpush1.bf16.msra.mxu0 %v881
    %947 = vmatprep.subr.bf16.mxu0 %v884
    %948 = vmatpush1.bf16.msra.mxu0 %v883
    %949 = vmatprep.subr.bf16.mxu0 %v886
    %950 = vmatpush1.bf16.msra.mxu0 %v885
    %951 = vmatprep.subr.bf16.mxu0 %v888
    %952 = vmatpush1.bf16.msra.mxu0 %v887
    %953 = vmatprep.subr.bf16.mxu0 %v890
    %954 = vmatpush1.bf16.msra.mxu0 %v889
    %955 = vmatprep.subr.bf16.mxu0 %v892
    %956 = vmatpush1.bf16.msra.mxu0 %v891
    %957 = vmatprep.mubr.bf16.mxu0 %v238
    %958 = vmatmul.mubr.bf16.gmra.mrb[0].mxu0 %v237
    %v959 = vpop.f32.mrb[0].mxu0
    %v960 = vadd.f32 0.0, %v959
    %v961 = vpop.f32.mrb[0].mxu0
    %v962 = vadd.f32 0.0, %v961
    %v963 = vpop.f32.mrb[0].mxu0
    %v964 = vadd.f32 0.0, %v963
    %v965 = vpop.f32.mrb[0].mxu0
    %v966 = vadd.f32 0.0, %v965
    %967 = vmatprep.mubr.bf16.mxu0 %v240
    %968 = vmatmul.mubr.bf16.gmra.mrb[0].mxu0 %v239
    %v969 = vpop.f32.mrb[0].mxu0
    %v970 = vadd.f32 0.0, %v969
    %v971 = vpop.f32.mrb[0].mxu0
    %v972 = vadd.f32 0.0, %v971
    %v973 = vpop.f32.mrb[0].mxu0
    %v974 = vadd.f32 0.0, %v973
    %v975 = vpop.f32.mrb[0].mxu0
    %v976 = vadd.f32 0.0, %v975
    %977 = vdwg.mxu0
    %v978 = vadd.f32 %v714, %v960
    %v979 = vadd.f32 %v716, %v962
    %v980 = vadd.f32 %v718, %v964
    %v981 = vadd.f32 %v720, %v966
    %v982 = vadd.f32 %v724, %v970
    %v983 = vadd.f32 %v726, %v972
    %v984 = vadd.f32 %v728, %v974
    %v985 = vadd.f32 %v730, %v976
    %v986 = vld [vmem:[%s6] sm:$0x3]
    %v988 = vlaneseq
    %v989 = vshrl.u32 %v988, 7
    %v990 = vsub.s32 0, %v989
    %v991 = vrot.slane %v986, %v990
    %v992 = vlaneseq
    %v993 = vshrl.u32 %v992, 7
    %v994 = vsub.s32 1, %v993
    %v995 = vrot.slane %v986, %v994
    %v998 = vadd.f32 %v978, %v991
    %v999 = vadd.f32 %v979, %v995
    %v1000 = vadd.f32 %v980, %v991
    %v1001 = vadd.f32 %v981, %v995
    %v1002 = vadd.f32 %v982, %v991
    %v1003 = vadd.f32 %v983, %v995
    %v1004 = vadd.f32 %v984, %v991
    %v1005 = vadd.f32 %v985, %v995
    %v1006 = vadd.f32 %v998, %v1000
    %v1007 = vadd.f32 %v1006, %v1002
    %v1008 = vadd.f32 %v1007, %v1004
    %v1009 = vrot.slane %v1008, 4
    %v1010 = vadd.f32 %v1008, %v1009
    %v1011 = vrot.slane %v1010, 2
    %v1012 = vadd.f32 %v1010, %v1011
    %v1013 = vrot.slane %v1012, 1
    %v1014 = vadd.f32 %v1012, %v1013
    %v1015 = vadd.f32 %v999, %v1001
    %v1016 = vadd.f32 %v1015, %v1003
    %v1017 = vadd.f32 %v1016, %v1005
    %v1018 = vrot.slane %v1017, 4
    %v1019 = vadd.f32 %v1017, %v1018
    %v1020 = vrot.slane %v1019, 2
    %v1021 = vadd.f32 %v1019, %v1020
    %v1022 = vrot.slane %v1021, 1
    %v1023 = vadd.f32 %v1021, %v1022
    %v1024 = vld [vmem:[%s4] sm:$0xff]
    %v1025 = vld [vmem:[%s4 + $0x8] sm:$0xff]
    %v1026 = vld [vmem:[%s4 + $0x10] sm:$0xff]
    %v1027 = vld [vmem:[%s4 + $0x18] sm:$0xff]
    %v1028 = vld [vmem:[%s4 + $0x20] sm:$0xff]
    %v1029 = vld [vmem:[%s4 + $0x28] sm:$0xff]
    %v1030 = vld [vmem:[%s4 + $0x30] sm:$0xff]
    %v1031 = vld [vmem:[%s4 + $0x38] sm:$0xff]
    %v1032 = vld [vmem:[%s4 + $0x40] sm:$0xff]
    %v1033 = vld [vmem:[%s4 + $0x48] sm:$0xff]
    %v1034 = vld [vmem:[%s4 + $0x50] sm:$0xff]
    %v1035 = vld [vmem:[%s4 + $0x58] sm:$0xff]
    %v1036 = vld [vmem:[%s4 + $0x60] sm:$0xff]
    %v1037 = vld [vmem:[%s4 + $0x68] sm:$0xff]
    %v1038 = vld [vmem:[%s4 + $0x70] sm:$0xff]
    %v1039 = vld [vmem:[%s4 + $0x78] sm:$0xff]
    %v1040 = vld [vmem:[%s4 + $0x80] sm:$0xff]
    %v1041 = vld [vmem:[%s4 + $0x88] sm:$0xff]
    %v1042 = vld [vmem:[%s4 + $0x90] sm:$0xff]
    %v1043 = vld [vmem:[%s4 + $0x98] sm:$0xff]
    %v1044 = vld [vmem:[%s4 + $0xa0] sm:$0xff]
    %v1045 = vld [vmem:[%s4 + $0xa8] sm:$0xff]
    %v1046 = vld [vmem:[%s4 + $0xb0] sm:$0xff]
    %v1047 = vld [vmem:[%s4 + $0xb8] sm:$0xff]
    %v1048 = vld [vmem:[%s4 + $0xc0] sm:$0xff]
    %v1049 = vld [vmem:[%s4 + $0xc8] sm:$0xff]
    %v1050 = vld [vmem:[%s4 + $0xd0] sm:$0xff]
    %v1051 = vld [vmem:[%s4 + $0xd8] sm:$0xff]
    %v1052 = vld [vmem:[%s4 + $0xe0] sm:$0xff]
    %v1053 = vld [vmem:[%s4 + $0xe8] sm:$0xff]
    %v1054 = vld [vmem:[%s4 + $0xf0] sm:$0xff]
    %v1055 = vld [vmem:[%s4 + $0xf8] sm:$0xff]
    %1056 = vmatprep.subr.mxu0 0.0
    %1057 = vmatpush1.msra.mxu0 %v1024
    %1058 = vmatprep.subr.mxu0 0.0
    %1059 = vmatpush1.msra.mxu0 %v1025
    %1060 = vmatprep.subr.mxu0 0.0
    %1061 = vmatpush1.msra.mxu0 %v1026
    %1062 = vmatprep.subr.mxu0 0.0
    %1063 = vmatpush1.msra.mxu0 %v1027
    %1064 = vmatprep.subr.mxu0 0.0
    %1065 = vmatpush1.msra.mxu0 %v1028
    %1066 = vmatprep.subr.mxu0 0.0
    %1067 = vmatpush1.msra.mxu0 %v1029
    %1068 = vmatprep.subr.mxu0 0.0
    %1069 = vmatpush1.msra.mxu0 %v1030
    %1070 = vmatprep.subr.mxu0 0.0
    %1071 = vmatpush1.msra.mxu0 %v1031
    %1072 = vmatprep.subr.mxu0 0.0
    %1073 = vmatpush1.msra.mxu0 %v1032
    %1074 = vmatprep.subr.mxu0 0.0
    %1075 = vmatpush1.msra.mxu0 %v1033
    %1076 = vmatprep.subr.mxu0 0.0
    %1077 = vmatpush1.msra.mxu0 %v1034
    %1078 = vmatprep.subr.mxu0 0.0
    %1079 = vmatpush1.msra.mxu0 %v1035
    %1080 = vmatprep.subr.mxu0 0.0
    %1081 = vmatpush1.msra.mxu0 %v1036
    %1082 = vmatprep.subr.mxu0 0.0
    %1083 = vmatpush1.msra.mxu0 %v1037
    %1084 = vmatprep.subr.mxu0 0.0
    %1085 = vmatpush1.msra.mxu0 %v1038
    %1086 = vmatprep.subr.mxu0 0.0
    %1087 = vmatpush1.msra.mxu0 %v1039
    %1088 = vmatprep.subr.mxu0 0.0
    %1089 = vmatpush1.msra.mxu0 %v1040
    %1090 = vmatprep.subr.mxu0 0.0
    %1091 = vmatpush1.msra.mxu0 %v1041
    %1092 = vmatprep.subr.mxu0 0.0
    %1093 = vmatpush1.msra.mxu0 %v1042
    %1094 = vmatprep.subr.mxu0 0.0
    %1095 = vmatpush1.msra.mxu0 %v1043
    %1096 = vmatprep.subr.mxu0 0.0
    %1097 = vmatpush1.msra.mxu0 %v1044
    %1098 = vmatprep.subr.mxu0 0.0
    %1099 = vmatpush1.msra.mxu0 %v1045
    %1100 = vmatprep.subr.mxu0 0.0
    %1101 = vmatpush1.msra.mxu0 %v1046
    %1102 = vmatprep.subr.mxu0 0.0
    %1103 = vmatpush1.msra.mxu0 %v1047
    %1104 = vmatprep.subr.mxu0 0.0
    %1105 = vmatpush1.msra.mxu0 %v1048
    %1106 = vmatprep.subr.mxu0 0.0
    %1107 = vmatpush1.msra.mxu0 %v1049
    %1108 = vmatprep.subr.mxu0 0.0
    %1109 = vmatpush1.msra.mxu0 %v1050
    %1110 = vmatprep.subr.mxu0 0.0
    %1111 = vmatpush1.msra.mxu0 %v1051
    %1112 = vmatprep.subr.mxu0 0.0
    %1113 = vmatpush1.msra.mxu0 %v1052
    %1114 = vmatprep.subr.mxu0 0.0
    %1115 = vmatpush1.msra.mxu0 %v1053
    %1116 = vmatprep.subr.mxu0 0.0
    %1117 = vmatpush1.msra.mxu0 %v1054
    %1118 = vmatprep.subr.mxu0 0.0
    %1119 = vmatpush1.msra.mxu0 %v1055
    %1120 = vmatprep.mubr.f32.mxu0 %v1023
    %1121 = vmatmul.mubr.f32.gmra.mrb[0].mxu0 %v1014
    %v1122 = vpop.f32.mrb[0].mxu0
    %v1123 = vadd.f32 0.0, %v1122
    %v1124 = vpop.f32.mrb[0].mxu0
    %1125 = vdwg.mxu0
    %v1126 = vmul.f32 %v1123, 0.001953125
    %v1127 = vld [vmem:[%s3] sm:$0xff]
    %v1128 = vld [vmem:[%s3 + $0x8] sm:$0xff]
    %v1129 = vld [vmem:[%s3 + $0x10] sm:$0xff]
    %v1130 = vld [vmem:[%s3 + $0x18] sm:$0xff]
    %vm1131 = vcmask 130048
    %v1133 = vsel %vm1131, %v1126, 0
    %1135 = vmatprep.subr.mxu0 %v1128
    %1136 = vmatpush1.msra.mxu0 %v1127
    %1137 = vmatprep.subr.mxu0 %v1130
    %1138 = vmatpush1.msra.mxu0 %v1129
    %1139 = vmatprep.subr.mxu0 0.0
    %1140 = vmatpush1.msra.mxu0 0.0
    %1141 = vmatprep.subr.mxu0 0.0
    %1142 = vmatpush1.msra.mxu0 0.0
    %1143 = vmatprep.subr.mxu0 0.0
    %1144 = vmatpush1.msra.mxu0 0.0
    %1145 = vmatprep.subr.mxu0 0.0
    %1146 = vmatpush1.msra.mxu0 0.0
    %1147 = vmatprep.subr.mxu0 0.0
    %1148 = vmatpush1.msra.mxu0 0.0
    %1149 = vmatprep.subr.mxu0 0.0
    %1150 = vmatpush1.msra.mxu0 0.0
    %1151 = vmatprep.subr.mxu0 0.0
    %1152 = vmatpush1.msra.mxu0 0.0
    %1153 = vmatprep.subr.mxu0 0.0
    %1154 = vmatpush1.msra.mxu0 0.0
    %1155 = vmatprep.subr.mxu0 0.0
    %1156 = vmatpush1.msra.mxu0 0.0
    %1157 = vmatprep.subr.mxu0 0.0
    %1158 = vmatpush1.msra.mxu0 0.0
    %1159 = vmatprep.subr.mxu0 0.0
    %1160 = vmatpush1.msra.mxu0 0.0
    %1161 = vmatprep.subr.mxu0 0.0
    %1162 = vmatpush1.msra.mxu0 0.0
    %1163 = vmatprep.subr.mxu0 0.0
    %1164 = vmatpush1.msra.mxu0 0.0
    %1165 = vmatprep.subr.mxu0 0.0
    %1166 = vmatpush1.msra.mxu0 0.0
    %1167 = vmatprep.subr.mxu0 0.0
    %1168 = vmatpush1.msra.mxu0 0.0
    %1169 = vmatprep.subr.mxu0 0.0
    %1170 = vmatpush1.msra.mxu0 0.0
    %1171 = vmatprep.subr.mxu0 0.0
    %1172 = vmatpush1.msra.mxu0 0.0
    %1173 = vmatprep.subr.mxu0 0.0
    %1174 = vmatpush1.msra.mxu0 0.0
    %1175 = vmatprep.subr.mxu0 0.0
    %1176 = vmatpush1.msra.mxu0 0.0
    %1177 = vmatprep.subr.mxu0 0.0
    %1178 = vmatpush1.msra.mxu0 0.0
    %1179 = vmatprep.subr.mxu0 0.0
    %1180 = vmatpush1.msra.mxu0 0.0
    %1181 = vmatprep.subr.mxu0 0.0
    %1182 = vmatpush1.msra.mxu0 0.0
    %1183 = vmatprep.subr.mxu0 0.0
    %1184 = vmatpush1.msra.mxu0 0.0
    %1185 = vmatprep.subr.mxu0 0.0
    %1186 = vmatpush1.msra.mxu0 0.0
    %1187 = vmatprep.subr.mxu0 0.0
    %1188 = vmatpush1.msra.mxu0 0.0
    %1189 = vmatprep.subr.mxu0 0.0
    %1190 = vmatpush1.msra.mxu0 0.0
    %1191 = vmatprep.subr.mxu0 0.0
    %1192 = vmatpush1.msra.mxu0 0.0
    %1193 = vmatprep.subr.mxu0 0.0
    %1194 = vmatpush1.msra.mxu0 0.0
    %1195 = vmatprep.subr.mxu0 0.0
    %1196 = vmatpush1.msra.mxu0 0.0
    %1197 = vmatprep.subr.mxu0 0.0
    %1198 = vmatpush1.msra.mxu0 0.0
    %1199 = vmatprep.mubr.f32.mxu0 0.0
    %1200 = vmatmul.mubr.f32.gmra.mrb[0].mxu0 %v1133
    %v1201 = vpop.f32.mrb[0].mxu0
    %v1202 = vadd.f32 0.0, %v1201
    %v1203 = vpop.f32.mrb[0].mxu0
    %v1204 = vadd.f32 0.0, %v1203
    %1205 = vdwg.mxu0
    %v1206 = vlaneseq
    %v1207 = vshrl.u32 %v1206, 7
    %v1208 = vsub.s32 0, %v1207
    %v1209 = vrot.slane %v1202, %v1208
    %v1210 = vlaneseq
    %v1211 = vshrl.u32 %v1210, 7
    %v1212 = vsub.s32 0, %v1211
    %v1213 = vrot.slane %v1204, %v1212
    %v1214 = vsub.f32 %v998, %v1209
    %v1215 = vsub.f32 %v999, %v1213
    %v1216 = vsub.f32 %v1000, %v1209
    %v1217 = vsub.f32 %v1001, %v1213
    %v1218 = vsub.f32 %v1002, %v1209
    %v1219 = vsub.f32 %v1003, %v1213
    %v1220 = vsub.f32 %v1004, %v1209
    %v1221 = vsub.f32 %v1005, %v1213
    %v1222 = vmul.f32 %v1214, %v1214
    %v1223 = vmul.f32 %v1215, %v1215
    %v1224 = vmul.f32 %v1216, %v1216
    %v1225 = vmul.f32 %v1217, %v1217
    %v1226 = vmul.f32 %v1218, %v1218
    %v1227 = vmul.f32 %v1219, %v1219
    %v1228 = vmul.f32 %v1220, %v1220
    %v1229 = vmul.f32 %v1221, %v1221
    %v1230 = vadd.f32 %v1222, %v1224
    %v1231 = vadd.f32 %v1230, %v1226
    %v1232 = vadd.f32 %v1231, %v1228
    %v1233 = vrot.slane %v1232, 4
    %v1234 = vadd.f32 %v1232, %v1233
    %v1235 = vrot.slane %v1234, 2
    %v1236 = vadd.f32 %v1234, %v1235
    %v1237 = vrot.slane %v1236, 1
    %v1238 = vadd.f32 %v1236, %v1237
    %v1239 = vadd.f32 %v1223, %v1225
    %v1240 = vadd.f32 %v1239, %v1227
    %v1241 = vadd.f32 %v1240, %v1229
    %v1242 = vrot.slane %v1241, 4
    %v1243 = vadd.f32 %v1241, %v1242
    %v1244 = vrot.slane %v1243, 2
    %v1245 = vadd.f32 %v1243, %v1244
    %v1246 = vrot.slane %v1245, 1
    %v1247 = vadd.f32 %v1245, %v1246
    %1248 = vmatprep.subr.mxu0 0.0
    %1249 = vmatpush1.msra.mxu0 %v1024
    %1250 = vmatprep.subr.mxu0 0.0
    %1251 = vmatpush1.msra.mxu0 %v1025
    %1252 = vmatprep.subr.mxu0 0.0
    %1253 = vmatpush1.msra.mxu0 %v1026
    %1254 = vmatprep.subr.mxu0 0.0
    %1255 = vmatpush1.msra.mxu0 %v1027
    %1256 = vmatprep.subr.mxu0 0.0
    %1257 = vmatpush1.msra.mxu0 %v1028
    %1258 = vmatprep.subr.mxu0 0.0
    %1259 = vmatpush1.msra.mxu0 %v1029
    %1260 = vmatprep.subr.mxu0 0.0
    %1261 = vmatpush1.msra.mxu0 %v1030
    %1262 = vmatprep.subr.mxu0 0.0
    %1263 = vmatpush1.msra.mxu0 %v1031
    %1264 = vmatprep.subr.mxu0 0.0
    %1265 = vmatpush1.msra.mxu0 %v1032
    %1266 = vmatprep.subr.mxu0 0.0
    %1267 = vmatpush1.msra.mxu0 %v1033
    %1268 = vmatprep.subr.mxu0 0.0
    %1269 = vmatpush1.msra.mxu0 %v1034
    %1270 = vmatprep.subr.mxu0 0.0
    %1271 = vmatpush1.msra.mxu0 %v1035
    %1272 = vmatprep.subr.mxu0 0.0
    %1273 = vmatpush1.msra.mxu0 %v1036
    %1274 = vmatprep.subr.mxu0 0.0
    %1275 = vmatpush1.msra.mxu0 %v1037
    %1276 = vmatprep.subr.mxu0 0.0
    %1277 = vmatpush1.msra.mxu0 %v1038
    %1278 = vmatprep.subr.mxu0 0.0
    %1279 = vmatpush1.msra.mxu0 %v1039
    %1280 = vmatprep.subr.mxu0 0.0
    %1281 = vmatpush1.msra.mxu0 %v1040
    %1282 = vmatprep.subr.mxu0 0.0
    %1283 = vmatpush1.msra.mxu0 %v1041
    %1284 = vmatprep.subr.mxu0 0.0
    %1285 = vmatpush1.msra.mxu0 %v1042
    %1286 = vmatprep.subr.mxu0 0.0
    %1287 = vmatpush1.msra.mxu0 %v1043
    %1288 = vmatprep.subr.mxu0 0.0
    %1289 = vmatpush1.msra.mxu0 %v1044
    %1290 = vmatprep.subr.mxu0 0.0
    %1291 = vmatpush1.msra.mxu0 %v1045
    %1292 = vmatprep.subr.mxu0 0.0
    %1293 = vmatpush1.msra.mxu0 %v1046
    %1294 = vmatprep.subr.mxu0 0.0
    %1295 = vmatpush1.msra.mxu0 %v1047
    %1296 = vmatprep.subr.mxu0 0.0
    %1297 = vmatpush1.msra.mxu0 %v1048
    %1298 = vmatprep.subr.mxu0 0.0
    %1299 = vmatpush1.msra.mxu0 %v1049
    %1300 = vmatprep.subr.mxu0 0.0
    %1301 = vmatpush1.msra.mxu0 %v1050
    %1302 = vmatprep.subr.mxu0 0.0
    %1303 = vmatpush1.msra.mxu0 %v1051
    %1304 = vmatprep.subr.mxu0 0.0
    %1305 = vmatpush1.msra.mxu0 %v1052
    %1306 = vmatprep.subr.mxu0 0.0
    %1307 = vmatpush1.msra.mxu0 %v1053
    %1308 = vmatprep.subr.mxu0 0.0
    %1309 = vmatpush1.msra.mxu0 %v1054
    %1310 = vmatprep.subr.mxu0 0.0
    %1311 = vmatpush1.msra.mxu0 %v1055
    %1312 = vmatprep.mubr.f32.mxu0 %v1247
    %1313 = vmatmul.mubr.f32.gmra.mrb[0].mxu0 %v1238
    %v1314 = vpop.f32.mrb[0].mxu0
    %v1315 = vadd.f32 0.0, %v1314
    %v1316 = vpop.f32.mrb[0].mxu0
    %1317 = vdwg.mxu0
    %v1318 = vmul.f32 %v1315, 0.001953125
    %v1320 = vsel %vm1131, %v1318, 0
    %1322 = vmatprep.subr.mxu0 %v1128
    %1323 = vmatpush1.msra.mxu0 %v1127
    %1324 = vmatprep.subr.mxu0 %v1130
    %1325 = vmatpush1.msra.mxu0 %v1129
    %1326 = vmatprep.subr.mxu0 0.0
    %1327 = vmatpush1.msra.mxu0 0.0
    %1328 = vmatprep.subr.mxu0 0.0
    %1329 = vmatpush1.msra.mxu0 0.0
    %1330 = vmatprep.subr.mxu0 0.0
    %1331 = vmatpush1.msra.mxu0 0.0
    %1332 = vmatprep.subr.mxu0 0.0
    %1333 = vmatpush1.msra.mxu0 0.0
    %1334 = vmatprep.subr.mxu0 0.0
    %1335 = vmatpush1.msra.mxu0 0.0
    %1336 = vmatprep.subr.mxu0 0.0
    %1337 = vmatpush1.msra.mxu0 0.0
    %1338 = vmatprep.subr.mxu0 0.0
    %1339 = vmatpush1.msra.mxu0 0.0
    %1340 = vmatprep.subr.mxu0 0.0
    %1341 = vmatpush1.msra.mxu0 0.0
    %1342 = vmatprep.subr.mxu0 0.0
    %1343 = vmatpush1.msra.mxu0 0.0
    %1344 = vmatprep.subr.mxu0 0.0
    %1345 = vmatpush1.msra.mxu0 0.0
    %1346 = vmatprep.subr.mxu0 0.0
    %1347 = vmatpush1.msra.mxu0 0.0
    %1348 = vmatprep.subr.mxu0 0.0
    %1349 = vmatpush1.msra.mxu0 0.0
    %1350 = vmatprep.subr.mxu0 0.0
    %1351 = vmatpush1.msra.mxu0 0.0
    %1352 = vmatprep.subr.mxu0 0.0
    %1353 = vmatpush1.msra.mxu0 0.0
    %1354 = vmatprep.subr.mxu0 0.0
    %1355 = vmatpush1.msra.mxu0 0.0
    %1356 = vmatprep.subr.mxu0 0.0
    %1357 = vmatpush1.msra.mxu0 0.0
    %1358 = vmatprep.subr.mxu0 0.0
    %1359 = vmatpush1.msra.mxu0 0.0
    %1360 = vmatprep.subr.mxu0 0.0
    %1361 = vmatpush1.msra.mxu0 0.0
    %1362 = vmatprep.subr.mxu0 0.0
    %1363 = vmatpush1.msra.mxu0 0.0
    %1364 = vmatprep.subr.mxu0 0.0
    %1365 = vmatpush1.msra.mxu0 0.0
    %1366 = vmatprep.subr.mxu0 0.0
    %1367 = vmatpush1.msra.mxu0 0.0
    %1368 = vmatprep.subr.mxu0 0.0
    %1369 = vmatpush1.msra.mxu0 0.0
    %1370 = vmatprep.subr.mxu0 0.0
    %1371 = vmatpush1.msra.mxu0 0.0
    %1372 = vmatprep.subr.mxu0 0.0
    %1373 = vmatpush1.msra.mxu0 0.0
    %1374 = vmatprep.subr.mxu0 0.0
    %1375 = vmatpush1.msra.mxu0 0.0
    %1376 = vmatprep.subr.mxu0 0.0
    %1377 = vmatpush1.msra.mxu0 0.0
    %1378 = vmatprep.subr.mxu0 0.0
    %1379 = vmatpush1.msra.mxu0 0.0
    %1380 = vmatprep.subr.mxu0 0.0
    %1381 = vmatpush1.msra.mxu0 0.0
    %1382 = vmatprep.subr.mxu0 0.0
    %1383 = vmatpush1.msra.mxu0 0.0
    %1384 = vmatprep.subr.mxu0 0.0
    %1385 = vmatpush1.msra.mxu0 0.0
    %1386 = vmatprep.mubr.f32.mxu0 0.0
    %1387 = vmatmul.mubr.f32.gmra.mrb[0].mxu0 %v1320
    %v1388 = vpop.f32.mrb[0].mxu0
    %v1389 = vadd.f32 1e-05, %v1388
    %v1390 = vpop.f32.mrb[0].mxu0
    %v1391 = vadd.f32 1e-05, %v1390
    %1392 = vdwg.mxu0
    %v1393 = vrsqrt.pop %v1389
    %v1394 = vrsqrt.pop %v1391
    %v1395 = vlaneseq
    %v1396 = vshrl.u32 %v1395, 7
    %v1397 = vsub.s32 0, %v1396
    %v1398 = vrot.slane %v1393, %v1397
    %v1399 = vlaneseq
    %v1400 = vshrl.u32 %v1399, 7
    %v1401 = vsub.s32 0, %v1400
    %v1402 = vrot.slane %v1394, %v1401
    %v1403 = vmul.f32 %v1214, %v1398
    %v1404 = vmul.f32 %v1215, %v1402
    %v1405 = vmul.f32 %v1216, %v1398
    %v1406 = vmul.f32 %v1217, %v1402
    %v1407 = vmul.f32 %v1218, %v1398
    %v1408 = vmul.f32 %v1219, %v1402
    %v1409 = vmul.f32 %v1220, %v1398
    %v1410 = vmul.f32 %v1221, %v1402
    %v1411 = vld [vmem:[%s7] sm:$0x3]
    %v1413 = vlaneseq
    %v1414 = vshrl.u32 %v1413, 7
    %v1415 = vsub.s32 0, %v1414
    %v1416 = vrot.slane %v1411, %v1415
    %v1417 = vlaneseq
    %v1418 = vshrl.u32 %v1417, 7
    %v1419 = vsub.s32 1, %v1418
    %v1420 = vrot.slane %v1411, %v1419
    %v1423 = vmul.f32 %v1403, %v1416
    %v1424 = vmul.f32 %v1404, %v1420
    %v1425 = vmul.f32 %v1405, %v1416
    %v1426 = vmul.f32 %v1406, %v1420
    %v1427 = vmul.f32 %v1407, %v1416
    %v1428 = vmul.f32 %v1408, %v1420
    %v1429 = vmul.f32 %v1409, %v1416
    %v1430 = vmul.f32 %v1410, %v1420
    %v1431 = vld [vmem:[%s8] sm:$0x3]
    %v1433 = vlaneseq
    %v1434 = vshrl.u32 %v1433, 7
    %v1435 = vsub.s32 0, %v1434
    %v1436 = vrot.slane %v1431, %v1435
    %v1437 = vlaneseq
    %v1438 = vshrl.u32 %v1437, 7
    %v1439 = vsub.s32 1, %v1438
    %v1440 = vrot.slane %v1431, %v1439
    %v1443 = vadd.f32 %v1423, %v1436
    %v1444 = vadd.f32 %v1424, %v1440
    %v1445 = vadd.f32 %v1425, %v1436
    %v1446 = vadd.f32 %v1426, %v1440
    %v1447 = vadd.f32 %v1427, %v1436
    %v1448 = vadd.f32 %v1428, %v1440
    %v1449 = vadd.f32 %v1429, %v1436
    %v1450 = vadd.f32 %v1430, %v1440
    %v1451 = vmax.f32 %v1443, 0.0
    %v1452 = vmax.f32 %v1444, 0.0
    %v1453 = vmax.f32 %v1445, 0.0
    %v1454 = vmax.f32 %v1446, 0.0
    %v1455 = vmax.f32 %v1447, 0.0
    %v1456 = vmax.f32 %v1448, 0.0
    %v1457 = vmax.f32 %v1449, 0.0
    %v1458 = vmax.f32 %v1450, 0.0
    %v1459 = vpack.c.bf16 %v1453, %v1451
    %v1460 = vpack.c.bf16 %v1454, %v1452
    %v1461 = vpack.c.bf16 %v1457, %v1455
    %v1462 = vpack.c.bf16 %v1458, %v1456
    %1463 = vmatprep.subr.bf16.mxu0 %v1460
    %1464 = vmatpush1.bf16.msra.mxu0 %v1459
    %1465 = vmatprep.subr.bf16.mxu0 %v1462
    %1466 = vmatpush1.bf16.msra.mxu0 %v1461
    %1467 = vmatprep.subr.bf16.mxu0 0
    %1468 = vmatpush1.bf16.msra.mxu0 0
    %1469 = vmatprep.subr.bf16.mxu0 0
    %1470 = vmatpush1.bf16.msra.mxu0 0
    %1471 = vmatprep.subr.bf16.mxu0 0
    %1472 = vmatpush1.bf16.msra.mxu0 0
    %1473 = vmatprep.subr.bf16.mxu0 0
    %1474 = vmatpush1.bf16.msra.mxu0 0
    %1475 = vmatprep.subr.bf16.mxu0 0
    %1476 = vmatpush1.bf16.msra.mxu0 0
    %1477 = vmatprep.subr.bf16.mxu0 0
    %1478 = vmatpush1.bf16.msra.mxu0 0
    %1479 = vmatprep.subr.bf16.mxu0 0
    %1480 = vmatpush1.bf16.msra.mxu0 0
    %1481 = vmatprep.subr.bf16.mxu0 0
    %1482 = vmatpush1.bf16.msra.mxu0 0
    %1483 = vmatprep.subr.bf16.mxu0 0
    %1484 = vmatpush1.bf16.msra.mxu0 0
    %1485 = vmatprep.subr.bf16.mxu0 0
    %1486 = vmatpush1.bf16.msra.mxu0 0
    %1487 = vmatprep.subr.bf16.mxu0 0
    %1488 = vmatpush1.bf16.msra.mxu0 0
    %1489 = vmatprep.subr.bf16.mxu0 0
    %1490 = vmatpush1.bf16.msra.mxu0 0
    %1491 = vmatprep.subr.bf16.mxu0 0
    %1492 = vmatpush1.bf16.msra.mxu0 0
    %1493 = vmatprep.subr.bf16.mxu0 0
    %1494 = vmatpush1.bf16.msra.mxu0 0
    %1495 = vmatprep.mubr.bf16.mxu0 0
    %1496 = vmatmul.mubr.bf16.gmra.mrb[0].mxu0 %v102
    %v1497 = vpop.f32.mrb[0].mxu0
    %v1498 = vadd.f32 0.0, %v1497
    %v1499 = vpop.f32.mrb[0].mxu0
    %v1500 = vadd.f32 0.0, %v1499
    %v1501 = vpop.f32.mrb[0].mxu0
    %v1502 = vadd.f32 0.0, %v1501
    %v1503 = vpop.f32.mrb[0].mxu0
    %v1504 = vadd.f32 0.0, %v1503
    %1505 = vmatprep.mubr.bf16.mxu0 0
    %1506 = vmatmul.mubr.bf16.gmra.mrb[0].mxu0 %v105
    %v1507 = vpop.f32.mrb[0].mxu0
    %v1508 = vadd.f32 0.0, %v1507
    %v1509 = vpop.f32.mrb[0].mxu0
    %v1510 = vadd.f32 0.0, %v1509
    %v1511 = vpop.f32.mrb[0].mxu0
    %v1512 = vadd.f32 0.0, %v1511
    %v1513 = vpop.f32.mrb[0].mxu0
    %v1514 = vadd.f32 0.0, %v1513
    %1515 = vdwg.mxu0
    %v1516 = vpack.c.bf16 %v1502, %v1498
    %v1517 = vpack.c.bf16 %v1504, %v1500
    %v1518 = vpack.c.bf16 %v1512, %v1508
    %v1519 = vpack.c.bf16 %v1514, %v1510
    %1520 = vmatprep.subr.bf16.mxu0 %v1460
    %1521 = vmatpush1.bf16.msra.mxu0 %v1459
    %1522 = vmatprep.subr.bf16.mxu0 %v1462
    %1523 = vmatpush1.bf16.msra.mxu0 %v1461
    %1524 = vmatprep.subr.bf16.mxu0 0
    %1525 = vmatpush1.bf16.msra.mxu0 0
    %1526 = vmatprep.subr.bf16.mxu0 0
    %1527 = vmatpush1.bf16.msra.mxu0 0
    %1528 = vmatprep.subr.bf16.mxu0 0
    %1529 = vmatpush1.bf16.msra.mxu0 0
    %1530 = vmatprep.subr.bf16.mxu0 0
    %1531 = vmatpush1.bf16.msra.mxu0 0
    %1532 = vmatprep.subr.bf16.mxu0 0
    %1533 = vmatpush1.bf16.msra.mxu0 0
    %1534 = vmatprep.subr.bf16.mxu0 0
    %1535 = vmatpush1.bf16.msra.mxu0 0
    %1536 = vmatprep.subr.bf16.mxu0 0
    %1537 = vmatpush1.bf16.msra.mxu0 0
    %1538 = vmatprep.subr.bf16.mxu0 0
    %1539 = vmatpush1.bf16.msra.mxu0 0
    %1540 = vmatprep.subr.bf16.mxu0 0
    %1541 = vmatpush1.bf16.msra.mxu0 0
    %1542 = vmatprep.subr.bf16.mxu0 0
    %1543 = vmatpush1.bf16.msra.mxu0 0
    %1544 = vmatprep.subr.bf16.mxu0 0
    %1545 = vmatpush1.bf16.msra.mxu0 0
    %1546 = vmatprep.subr.bf16.mxu0 0
    %1547 = vmatpush1.bf16.msra.mxu0 0
    %1548 = vmatprep.subr.bf16.mxu0 0
    %1549 = vmatpush1.bf16.msra.mxu0 0
    %1550 = vmatprep.subr.bf16.mxu0 0
    %1551 = vmatpush1.bf16.msra.mxu0 0
    %1552 = vmatprep.mubr.bf16.mxu0 0
    %1553 = vmatmul.mubr.bf16.gmra.mrb[0].mxu0 %v179
    %v1554 = vpop.f32.mrb[0].mxu0
    %v1555 = vadd.f32 0.0, %v1554
    %v1556 = vpop.f32.mrb[0].mxu0
    %v1557 = vadd.f32 0.0, %v1556
    %v1558 = vpop.f32.mrb[0].mxu0
    %v1559 = vadd.f32 0.0, %v1558
    %v1560 = vpop.f32.mrb[0].mxu0
    %v1561 = vadd.f32 0.0, %v1560
    %1562 = vmatprep.mubr.bf16.mxu0 0
    %1563 = vmatmul.mubr.bf16.gmra.mrb[0].mxu0 %v182
    %v1564 = vpop.f32.mrb[0].mxu0
    %v1565 = vadd.f32 0.0, %v1564
    %v1566 = vpop.f32.mrb[0].mxu0
    %v1567 = vadd.f32 0.0, %v1566
    %v1568 = vpop.f32.mrb[0].mxu0
    %v1569 = vadd.f32 0.0, %v1568
    %v1570 = vpop.f32.mrb[0].mxu0
    %v1571 = vadd.f32 0.0, %v1570
    %1572 = vdwg.mxu0
    %v1573 = vpack.c.bf16 %v1559, %v1555
    %v1574 = vpack.c.bf16 %v1561, %v1557
    %v1575 = vpack.c.bf16 %v1569, %v1565
    %v1576 = vpack.c.bf16 %v1571, %v1567
    %v1577 = vld [vmem:[#allocation5] sm:$0xff]
    %v1578 = vld [vmem:[#allocation5 + $0x8] sm:$0xff]
    %v1579 = vld [vmem:[#allocation5 + $0x10] sm:$0xff]
    %v1580 = vld [vmem:[#allocation5 + $0x18] sm:$0xff]
    %v1581 = vld [vmem:[#allocation5 + $0x20] sm:$0xff]
    %v1582 = vld [vmem:[#allocation5 + $0x28] sm:$0xff]
    %v1583 = vld [vmem:[#allocation5 + $0x30] sm:$0xff]
    %v1584 = vld [vmem:[#allocation5 + $0x38] sm:$0xff]
    %v1585 = vld [vmem:[#allocation5 + $0x40] sm:$0xff]
    %v1586 = vld [vmem:[#allocation5 + $0x48] sm:$0xff]
    %v1587 = vld [vmem:[#allocation5 + $0x50] sm:$0xff]
    %v1588 = vld [vmem:[#allocation5 + $0x58] sm:$0xff]
    %v1589 = vld [vmem:[#allocation5 + $0x60] sm:$0xff]
    %v1590 = vld [vmem:[#allocation5 + $0x68] sm:$0xff]
    %v1591 = vld [vmem:[#allocation5 + $0x70] sm:$0xff]
    %v1592 = vld [vmem:[#allocation5 + $0x78] sm:$0xff]
    %v1593 = vld [vmem:[#allocation5 + $0x80] sm:$0xff]
    %v1594 = vld [vmem:[#allocation5 + $0x88] sm:$0xff]
    %v1595 = vld [vmem:[#allocation5 + $0x90] sm:$0xff]
    %v1596 = vld [vmem:[#allocation5 + $0x98] sm:$0xff]
    %v1597 = vld [vmem:[#allocation5 + $0xa0] sm:$0xff]
    %v1598 = vld [vmem:[#allocation5 + $0xa8] sm:$0xff]
    %v1599 = vld [vmem:[#allocation5 + $0xb0] sm:$0xff]
    %v1600 = vld [vmem:[#allocation5 + $0xb8] sm:$0xff]
    %v1601 = vld [vmem:[#allocation5 + $0xc0] sm:$0xff]
    %v1602 = vld [vmem:[#allocation5 + $0xc8] sm:$0xff]
    %v1603 = vld [vmem:[#allocation5 + $0xd0] sm:$0xff]
    %v1604 = vld [vmem:[#allocation5 + $0xd8] sm:$0xff]
    %v1605 = vld [vmem:[#allocation5 + $0xe0] sm:$0xff]
    %v1606 = vld [vmem:[#allocation5 + $0xe8] sm:$0xff]
    %v1607 = vld [vmem:[#allocation5 + $0xf0] sm:$0xff]
    %v1608 = vld [vmem:[#allocation5 + $0xf8] sm:$0xff]
    %s1609 = scalar_lea.vmem [#allocation5], 256
    %v1610 = vld [vmem:[%s1609] sm:$0xff]
    %v1611 = vld [vmem:[%s1609 + $0x8] sm:$0xff]
    %v1612 = vld [vmem:[%s1609 + $0x10] sm:$0xff]
    %v1613 = vld [vmem:[%s1609 + $0x18] sm:$0xff]
    %v1614 = vld [vmem:[%s1609 + $0x20] sm:$0xff]
    %v1615 = vld [vmem:[%s1609 + $0x28] sm:$0xff]
    %v1616 = vld [vmem:[%s1609 + $0x30] sm:$0xff]
    %v1617 = vld [vmem:[%s1609 + $0x38] sm:$0xff]
    %v1618 = vld [vmem:[%s1609 + $0x40] sm:$0xff]
    %v1619 = vld [vmem:[%s1609 + $0x48] sm:$0xff]
    %v1620 = vld [vmem:[%s1609 + $0x50] sm:$0xff]
    %v1621 = vld [vmem:[%s1609 + $0x58] sm:$0xff]
    %v1622 = vld [vmem:[%s1609 + $0x60] sm:$0xff]
    %v1623 = vld [vmem:[%s1609 + $0x68] sm:$0xff]
    %v1624 = vld [vmem:[%s1609 + $0x70] sm:$0xff]
    %v1625 = vld [vmem:[%s1609 + $0x78] sm:$0xff]
    %v1626 = vld [vmem:[%s1609 + $0x80] sm:$0xff]
    %v1627 = vld [vmem:[%s1609 + $0x88] sm:$0xff]
    %v1628 = vld [vmem:[%s1609 + $0x90] sm:$0xff]
    %v1629 = vld [vmem:[%s1609 + $0x98] sm:$0xff]
    %v1630 = vld [vmem:[%s1609 + $0xa0] sm:$0xff]
    %v1631 = vld [vmem:[%s1609 + $0xa8] sm:$0xff]
    %v1632 = vld [vmem:[%s1609 + $0xb0] sm:$0xff]
    %v1633 = vld [vmem:[%s1609 + $0xb8] sm:$0xff]
    %v1634 = vld [vmem:[%s1609 + $0xc0] sm:$0xff]
    %v1635 = vld [vmem:[%s1609 + $0xc8] sm:$0xff]
    %v1636 = vld [vmem:[%s1609 + $0xd0] sm:$0xff]
    %v1637 = vld [vmem:[%s1609 + $0xd8] sm:$0xff]
    %v1638 = vld [vmem:[%s1609 + $0xe0] sm:$0xff]
    %v1639 = vld [vmem:[%s1609 + $0xe8] sm:$0xff]
    %v1640 = vld [vmem:[%s1609 + $0xf0] sm:$0xff]
    %v1641 = vld [vmem:[%s1609 + $0xf8] sm:$0xff]
    %v1674 = vunpack.c.l.b16 %v1610
    %v1675 = vunpack.c.h.b16 %v1610
    %v1676 = vunpack.c.l.b16 %v1611
    %v1677 = vunpack.c.h.b16 %v1611
    %v1678 = vunpack.c.l.b16 %v1612
    %v1679 = vunpack.c.h.b16 %v1612
    %v1680 = vunpack.c.l.b16 %v1613
    %v1681 = vunpack.c.h.b16 %v1613
    %v1682 = vunpack.c.l.b16 %v1614
    %v1683 = vunpack.c.h.b16 %v1614
    %v1684 = vunpack.c.l.b16 %v1615
    %v1685 = vunpack.c.h.b16 %v1615
    %v1686 = vunpack.c.l.b16 %v1616
    %v1687 = vunpack.c.h.b16 %v1616
    %v1688 = vunpack.c.l.b16 %v1617
    %v1689 = vunpack.c.h.b16 %v1617
    %v1690 = vunpack.c.l.b16 %v1618
    %v1691 = vunpack.c.h.b16 %v1618
    %v1692 = vunpack.c.l.b16 %v1619
    %v1693 = vunpack.c.h.b16 %v1619
    %v1694 = vunpack.c.l.b16 %v1620
    %v1695 = vunpack.c.h.b16 %v1620
    %v1696 = vunpack.c.l.b16 %v1621
    %v1697 = vunpack.c.h.b16 %v1621
    %v1698 = vunpack.c.l.b16 %v1622
    %v1699 = vunpack.c.h.b16 %v1622
    %v1700 = vunpack.c.l.b16 %v1623
    %v1701 = vunpack.c.h.b16 %v1623
    %v1702 = vunpack.c.l.b16 %v1624
    %v1703 = vunpack.c.h.b16 %v1624
    %v1704 = vunpack.c.l.b16 %v1625
    %v1705 = vunpack.c.h.b16 %v1625
    %v1706 = vunpack.c.l.b16 %v1626
    %v1707 = vunpack.c.h.b16 %v1626
    %v1708 = vunpack.c.l.b16 %v1627
    %v1709 = vunpack.c.h.b16 %v1627
    %v1710 = vunpack.c.l.b16 %v1628
    %v1711 = vunpack.c.h.b16 %v1628
    %v1712 = vunpack.c.l.b16 %v1629
    %v1713 = vunpack.c.h.b16 %v1629
    %v1714 = vunpack.c.l.b16 %v1630
    %v1715 = vunpack.c.h.b16 %v1630
    %v1716 = vunpack.c.l.b16 %v1631
    %v1717 = vunpack.c.h.b16 %v1631
    %v1718 = vunpack.c.l.b16 %v1632
    %v1719 = vunpack.c.h.b16 %v1632
    %v1720 = vunpack.c.l.b16 %v1633
    %v1721 = vunpack.c.h.b16 %v1633
    %v1722 = vunpack.c.l.b16 %v1634
    %v1723 = vunpack.c.h.b16 %v1634
    %v1724 = vunpack.c.l.b16 %v1635
    %v1725 = vunpack.c.h.b16 %v1635
    %v1726 = vunpack.c.l.b16 %v1636
    %v1727 = vunpack.c.h.b16 %v1636
    %v1728 = vunpack.c.l.b16 %v1637
    %v1729 = vunpack.c.h.b16 %v1637
    %v1730 = vunpack.c.l.b16 %v1638
    %v1731 = vunpack.c.h.b16 %v1638
    %v1732 = vunpack.c.l.b16 %v1639
    %v1733 = vunpack.c.h.b16 %v1639
    %v1734 = vunpack.c.l.b16 %v1640
    %v1735 = vunpack.c.h.b16 %v1640
    %v1736 = vunpack.c.l.b16 %v1641
    %v1737 = vunpack.c.h.b16 %v1641
    %v1738 = vpack.c.b16 %v1676, %v1674
    %v1739 = vpack.c.b16 %v1677, %v1675
    %v1740 = vpack.c.b16 %v1680, %v1678
    %v1741 = vpack.c.b16 %v1681, %v1679
    %v1742 = vpack.c.b16 %v1684, %v1682
    %v1743 = vpack.c.b16 %v1685, %v1683
    %v1744 = vpack.c.b16 %v1688, %v1686
    %v1745 = vpack.c.b16 %v1689, %v1687
    %v1746 = vpack.c.b16 %v1692, %v1690
    %v1747 = vpack.c.b16 %v1693, %v1691
    %v1748 = vpack.c.b16 %v1696, %v1694
    %v1749 = vpack.c.b16 %v1697, %v1695
    %v1750 = vpack.c.b16 %v1700, %v1698
    %v1751 = vpack.c.b16 %v1701, %v1699
    %v1752 = vpack.c.b16 %v1704, %v1702
    %v1753 = vpack.c.b16 %v1705, %v1703
    %v1754 = vpack.c.b16 %v1708, %v1706
    %v1755 = vpack.c.b16 %v1709, %v1707
    %v1756 = vpack.c.b16 %v1712, %v1710
    %v1757 = vpack.c.b16 %v1713, %v1711
    %v1758 = vpack.c.b16 %v1716, %v1714
    %v1759 = vpack.c.b16 %v1717, %v1715
    %v1760 = vpack.c.b16 %v1720, %v1718
    %v1761 = vpack.c.b16 %v1721, %v1719
    %v1762 = vpack.c.b16 %v1724, %v1722
    %v1763 = vpack.c.b16 %v1725, %v1723
    %v1764 = vpack.c.b16 %v1728, %v1726
    %v1765 = vpack.c.b16 %v1729, %v1727
    %v1766 = vpack.c.b16 %v1732, %v1730
    %v1767 = vpack.c.b16 %v1733, %v1731
    %v1768 = vpack.c.b16 %v1736, %v1734
    %v1769 = vpack.c.b16 %v1737, %v1735
    %1802 = vmatprep.subr.bf16.mxu0 %v1739
    %1803 = vmatpush1.bf16.msra.mxu0 %v1738
    %1804 = vmatprep.subr.bf16.mxu0 %v1741
    %1805 = vmatpush1.bf16.msra.mxu0 %v1740
    %1806 = vmatprep.subr.bf16.mxu0 %v1743
    %1807 = vmatpush1.bf16.msra.mxu0 %v1742
    %1808 = vmatprep.subr.bf16.mxu0 %v1745
    %1809 = vmatpush1.bf16.msra.mxu0 %v1744
    %1810 = vmatprep.subr.bf16.mxu0 %v1747
    %1811 = vmatpush1.bf16.msra.mxu0 %v1746
    %1812 = vmatprep.subr.bf16.mxu0 %v1749
    %1813 = vmatpush1.bf16.msra.mxu0 %v1748
    %1814 = vmatprep.subr.bf16.mxu0 %v1751
    %1815 = vmatpush1.bf16.msra.mxu0 %v1750
    %1816 = vmatprep.subr.bf16.mxu0 %v1753
    %1817 = vmatpush1.bf16.msra.mxu0 %v1752
    %1818 = vmatprep.subr.bf16.mxu0 %v1755
    %1819 = vmatpush1.bf16.msra.mxu0 %v1754
    %1820 = vmatprep.subr.bf16.mxu0 %v1757
    %1821 = vmatpush1.bf16.msra.mxu0 %v1756
    %1822 = vmatprep.subr.bf16.mxu0 %v1759
    %1823 = vmatpush1.bf16.msra.mxu0 %v1758
    %1824 = vmatprep.subr.bf16.mxu0 %v1761
    %1825 = vmatpush1.bf16.msra.mxu0 %v1760
    %1826 = vmatprep.subr.bf16.mxu0 %v1763
    %1827 = vmatpush1.bf16.msra.mxu0 %v1762
    %1828 = vmatprep.subr.bf16.mxu0 %v1765
    %1829 = vmatpush1.bf16.msra.mxu0 %v1764
    %1830 = vmatprep.subr.bf16.mxu0 %v1767
    %1831 = vmatpush1.bf16.msra.mxu0 %v1766
    %1832 = vmatprep.subr.bf16.mxu0 %v1769
    %1833 = vmatpush1.bf16.msra.mxu0 %v1768
    %1834 = vmatprep.mubr.bf16.mxu0 %v1460
    %1835 = vmatmul.mubr.bf16.gmra.mrb[0].mxu0 %v1459
    %v1836 = vpop.f32.mrb[0].mxu0
    %v1837 = vadd.f32 0.0, %v1836
    %v1838 = vpop.f32.mrb[0].mxu0
    %v1839 = vadd.f32 0.0, %v1838
    %v1840 = vpop.f32.mrb[0].mxu0
    %v1841 = vadd.f32 0.0, %v1840
    %v1842 = vpop.f32.mrb[0].mxu0
    %v1843 = vadd.f32 0.0, %v1842
    %1844 = vmatprep.mubr.bf16.mxu0 %v1462
    %1845 = vmatmul.mubr.bf16.gmra.mrb[0].mxu0 %v1461
    %v1846 = vpop.f32.mrb[0].mxu0
    %v1847 = vadd.f32 0.0, %v1846
    %v1848 = vpop.f32.mrb[0].mxu0
    %v1849 = vadd.f32 0.0, %v1848
    %v1850 = vpop.f32.mrb[0].mxu0
    %v1851 = vadd.f32 0.0, %v1850
    %v1852 = vpop.f32.mrb[0].mxu0
    %v1853 = vadd.f32 0.0, %v1852
    %1854 = vdwg.mxu0
    %v1887 = vunpack.c.l.b16 %v1577
    %v1888 = vunpack.c.h.b16 %v1577
    %v1889 = vunpack.c.l.b16 %v1578
    %v1890 = vunpack.c.h.b16 %v1578
    %v1891 = vunpack.c.l.b16 %v1579
    %v1892 = vunpack.c.h.b16 %v1579
    %v1893 = vunpack.c.l.b16 %v1580
    %v1894 = vunpack.c.h.b16 %v1580
    %v1895 = vunpack.c.l.b16 %v1581
    %v1896 = vunpack.c.h.b16 %v1581
    %v1897 = vunpack.c.l.b16 %v1582
    %v1898 = vunpack.c.h.b16 %v1582
    %v1899 = vunpack.c.l.b16 %v1583
    %v1900 = vunpack.c.h.b16 %v1583
    %v1901 = vunpack.c.l.b16 %v1584
    %v1902 = vunpack.c.h.b16 %v1584
    %v1903 = vunpack.c.l.b16 %v1585
    %v1904 = vunpack.c.h.b16 %v1585
    %v1905 = vunpack.c.l.b16 %v1586
    %v1906 = vunpack.c.h.b16 %v1586
    %v1907 = vunpack.c.l.b16 %v1587
    %v1908 = vunpack.c.h.b16 %v1587
    %v1909 = vunpack.c.l.b16 %v1588
    %v1910 = vunpack.c.h.b16 %v1588
    %v1911 = vunpack.c.l.b16 %v1589
    %v1912 = vunpack.c.h.b16 %v1589
    %v1913 = vunpack.c.l.b16 %v1590
    %v1914 = vunpack.c.h.b16 %v1590
    %v1915 = vunpack.c.l.b16 %v1591
    %v1916 = vunpack.c.h.b16 %v1591
    %v1917 = vunpack.c.l.b16 %v1592
    %v1918 = vunpack.c.h.b16 %v1592
    %v1919 = vunpack.c.l.b16 %v1593
    %v1920 = vunpack.c.h.b16 %v1593
    %v1921 = vunpack.c.l.b16 %v1594
    %v1922 = vunpack.c.h.b16 %v1594
    %v1923 = vunpack.c.l.b16 %v1595
    %v1924 = vunpack.c.h.b16 %v1595
    %v1925 = vunpack.c.l.b16 %v1596
    %v1926 = vunpack.c.h.b16 %v1596
    %v1927 = vunpack.c.l.b16 %v1597
    %v1928 = vunpack.c.h.b16 %v1597
    %v1929 = vunpack.c.l.b16 %v1598
    %v1930 = vunpack.c.h.b16 %v1598
    %v1931 = vunpack.c.l.b16 %v1599
    %v1932 = vunpack.c.h.b16 %v1599
    %v1933 = vunpack.c.l.b16 %v1600
    %v1934 = vunpack.c.h.b16 %v1600
    %v1935 = vunpack.c.l.b16 %v1601
    %v1936 = vunpack.c.h.b16 %v1601
    %v1937 = vunpack.c.l.b16 %v1602
    %v1938 = vunpack.c.h.b16 %v1602
    %v1939 = vunpack.c.l.b16 %v1603
    %v1940 = vunpack.c.h.b16 %v1603
    %v1941 = vunpack.c.l.b16 %v1604
    %v1942 = vunpack.c.h.b16 %v1604
    %v1943 = vunpack.c.l.b16 %v1605
    %v1944 = vunpack.c.h.b16 %v1605
    %v1945 = vunpack.c.l.b16 %v1606
    %v1946 = vunpack.c.h.b16 %v1606
    %v1947 = vunpack.c.l.b16 %v1607
    %v1948 = vunpack.c.h.b16 %v1607
    %v1949 = vunpack.c.l.b16 %v1608
    %v1950 = vunpack.c.h.b16 %v1608
    %v1951 = vpack.c.b16 %v1889, %v1887
    %v1952 = vpack.c.b16 %v1890, %v1888
    %v1953 = vpack.c.b16 %v1893, %v1891
    %v1954 = vpack.c.b16 %v1894, %v1892
    %v1955 = vpack.c.b16 %v1897, %v1895
    %v1956 = vpack.c.b16 %v1898, %v1896
    %v1957 = vpack.c.b16 %v1901, %v1899
    %v1958 = vpack.c.b16 %v1902, %v1900
    %v1959 = vpack.c.b16 %v1905, %v1903
    %v1960 = vpack.c.b16 %v1906, %v1904
    %v1961 = vpack.c.b16 %v1909, %v1907
    %v1962 = vpack.c.b16 %v1910, %v1908
    %v1963 = vpack.c.b16 %v1913, %v1911
    %v1964 = vpack.c.b16 %v1914, %v1912
    %v1965 = vpack.c.b16 %v1917, %v1915
    %v1966 = vpack.c.b16 %v1918, %v1916
    %v1967 = vpack.c.b16 %v1921, %v1919
    %v1968 = vpack.c.b16 %v1922, %v1920
    %v1969 = vpack.c.b16 %v1925, %v1923
    %v1970 = vpack.c.b16 %v1926, %v1924
    %v1971 = vpack.c.b16 %v1929, %v1927
    %v1972 = vpack.c.b16 %v1930, %v1928
    %v1973 = vpack.c.b16 %v1933, %v1931
    %v1974 = vpack.c.b16 %v1934, %v1932
    %v1975 = vpack.c.b16 %v1937, %v1935
    %v1976 = vpack.c.b16 %v1938, %v1936
    %v1977 = vpack.c.b16 %v1941, %v1939
    %v1978 = vpack.c.b16 %v1942, %v1940
    %v1979 = vpack.c.b16 %v1945, %v1943
    %v1980 = vpack.c.b16 %v1946, %v1944
    %v1981 = vpack.c.b16 %v1949, %v1947
    %v1982 = vpack.c.b16 %v1950, %v1948
    %2015 = vmatprep.subr.bf16.mxu0 %v1952
    %2016 = vmatpush1.bf16.msra.mxu0 %v1951
    %2017 = vmatprep.subr.bf16.mxu0 %v1954
    %2018 = vmatpush1.bf16.msra.mxu0 %v1953
    %2019 = vmatprep.subr.bf16.mxu0 %v1956
    %2020 = vmatpush1.bf16.msra.mxu0 %v1955
    %2021 = vmatprep.subr.bf16.mxu0 %v1958
    %2022 = vmatpush1.bf16.msra.mxu0 %v1957
    %2023 = vmatprep.subr.bf16.mxu0 %v1960
    %2024 = vmatpush1.bf16.msra.mxu0 %v1959
    %2025 = vmatprep.subr.bf16.mxu0 %v1962
    %2026 = vmatpush1.bf16.msra.mxu0 %v1961
    %2027 = vmatprep.subr.bf16.mxu0 %v1964
    %2028 = vmatpush1.bf16.msra.mxu0 %v1963
    %2029 = vmatprep.subr.bf16.mxu0 %v1966
    %2030 = vmatpush1.bf16.msra.mxu0 %v1965
    %2031 = vmatprep.subr.bf16.mxu0 %v1968
    %2032 = vmatpush1.bf16.msra.mxu0 %v1967
    %2033 = vmatprep.subr.bf16.mxu0 %v1970
    %2034 = vmatpush1.bf16.msra.mxu0 %v1969
    %2035 = vmatprep.subr.bf16.mxu0 %v1972
    %2036 = vmatpush1.bf16.msra.mxu0 %v1971
    %2037 = vmatprep.subr.bf16.mxu0 %v1974
    %2038 = vmatpush1.bf16.msra.mxu0 %v1973
    %2039 = vmatprep.subr.bf16.mxu0 %v1976
    %2040 = vmatpush1.bf16.msra.mxu0 %v1975
    %2041 = vmatprep.subr.bf16.mxu0 %v1978
    %2042 = vmatpush1.bf16.msra.mxu0 %v1977
    %2043 = vmatprep.subr.bf16.mxu0 %v1980
    %2044 = vmatpush1.bf16.msra.mxu0 %v1979
    %2045 = vmatprep.subr.bf16.mxu0 %v1982
    %2046 = vmatpush1.bf16.msra.mxu0 %v1981
    %2047 = vmatprep.mubr.bf16.mxu0 %v1517
    %2048 = vmatmul.mubr.bf16.gmra.mrb[0].mxu0 %v1516
    %v2049 = vpop.f32.mrb[0].mxu0
    %v2050 = vadd.f32 %v1837, %v2049
    %v2051 = vpop.f32.mrb[0].mxu0
    %v2052 = vadd.f32 %v1839, %v2051
    %v2053 = vpop.f32.mrb[0].mxu0
    %v2054 = vadd.f32 %v1841, %v2053
    %v2055 = vpop.f32.mrb[0].mxu0
    %v2056 = vadd.f32 %v1843, %v2055
    %2057 = vmatprep.mubr.bf16.mxu0 %v1519
    %2058 = vmatmul.mubr.bf16.gmra.mrb[0].mxu0 %v1518
    %v2059 = vpop.f32.mrb[0].mxu0
    %v2060 = vadd.f32 %v1847, %v2059
    %v2061 = vpop.f32.mrb[0].mxu0
    %v2062 = vadd.f32 %v1849, %v2061
    %v2063 = vpop.f32.mrb[0].mxu0
    %v2064 = vadd.f32 %v1851, %v2063
    %v2065 = vpop.f32.mrb[0].mxu0
    %v2066 = vadd.f32 %v1853, %v2065
    %2067 = vdwg.mxu0
    %s2068 = scalar_lea.vmem [#allocation5], 512
    %v2069 = vld [vmem:[%s2068] sm:$0xff]
    %v2070 = vld [vmem:[%s2068 + $0x8] sm:$0xff]
    %v2071 = vld [vmem:[%s2068 + $0x10] sm:$0xff]
    %v2072 = vld [vmem:[%s2068 + $0x18] sm:$0xff]
    %v2073 = vld [vmem:[%s2068 + $0x20] sm:$0xff]
    %v2074 = vld [vmem:[%s2068 + $0x28] sm:$0xff]
    %v2075 = vld [vmem:[%s2068 + $0x30] sm:$0xff]
    %v2076 = vld [vmem:[%s2068 + $0x38] sm:$0xff]
    %v2077 = vld [vmem:[%s2068 + $0x40] sm:$0xff]
    %v2078 = vld [vmem:[%s2068 + $0x48] sm:$0xff]
    %v2079 = vld [vmem:[%s2068 + $0x50] sm:$0xff]
    %v2080 = vld [vmem:[%s2068 + $0x58] sm:$0xff]
    %v2081 = vld [vmem:[%s2068 + $0x60] sm:$0xff]
    %v2082 = vld [vmem:[%s2068 + $0x68] sm:$0xff]
    %v2083 = vld [vmem:[%s2068 + $0x70] sm:$0xff]
    %v2084 = vld [vmem:[%s2068 + $0x78] sm:$0xff]
    %v2085 = vld [vmem:[%s2068 + $0x80] sm:$0xff]
    %v2086 = vld [vmem:[%s2068 + $0x88] sm:$0xff]
    %v2087 = vld [vmem:[%s2068 + $0x90] sm:$0xff]
    %v2088 = vld [vmem:[%s2068 + $0x98] sm:$0xff]
    %v2089 = vld [vmem:[%s2068 + $0xa0] sm:$0xff]
    %v2090 = vld [vmem:[%s2068 + $0xa8] sm:$0xff]
    %v2091 = vld [vmem:[%s2068 + $0xb0] sm:$0xff]
    %v2092 = vld [vmem:[%s2068 + $0xb8] sm:$0xff]
    %v2093 = vld [vmem:[%s2068 + $0xc0] sm:$0xff]
    %v2094 = vld [vmem:[%s2068 + $0xc8] sm:$0xff]
    %v2095 = vld [vmem:[%s2068 + $0xd0] sm:$0xff]
    %v2096 = vld [vmem:[%s2068 + $0xd8] sm:$0xff]
    %v2097 = vld [vmem:[%s2068 + $0xe0] sm:$0xff]
    %v2098 = vld [vmem:[%s2068 + $0xe8] sm:$0xff]
    %v2099 = vld [vmem:[%s2068 + $0xf0] sm:$0xff]
    %v2100 = vld [vmem:[%s2068 + $0xf8] sm:$0xff]
    %v2133 = vunpack.c.l.b16 %v2069
    %v2134 = vunpack.c.h.b16 %v2069
    %v2135 = vunpack.c.l.b16 %v2070
    %v2136 = vunpack.c.h.b16 %v2070
    %v2137 = vunpack.c.l.b16 %v2071
    %v2138 = vunpack.c.h.b16 %v2071
    %v2139 = vunpack.c.l.b16 %v2072
    %v2140 = vunpack.c.h.b16 %v2072
    %v2141 = vunpack.c.l.b16 %v2073
    %v2142 = vunpack.c.h.b16 %v2073
    %v2143 = vunpack.c.l.b16 %v2074
    %v2144 = vunpack.c.h.b16 %v2074
    %v2145 = vunpack.c.l.b16 %v2075
    %v2146 = vunpack.c.h.b16 %v2075
    %v2147 = vunpack.c.l.b16 %v2076
    %v2148 = vunpack.c.h.b16 %v2076
    %v2149 = vunpack.c.l.b16 %v2077
    %v2150 = vunpack.c.h.b16 %v2077
    %v2151 = vunpack.c.l.b16 %v2078
    %v2152 = vunpack.c.h.b16 %v2078
    %v2153 = vunpack.c.l.b16 %v2079
    %v2154 = vunpack.c.h.b16 %v2079
    %v2155 = vunpack.c.l.b16 %v2080
    %v2156 = vunpack.c.h.b16 %v2080
    %v2157 = vunpack.c.l.b16 %v2081
    %v2158 = vunpack.c.h.b16 %v2081
    %v2159 = vunpack.c.l.b16 %v2082
    %v2160 = vunpack.c.h.b16 %v2082
    %v2161 = vunpack.c.l.b16 %v2083
    %v2162 = vunpack.c.h.b16 %v2083
    %v2163 = vunpack.c.l.b16 %v2084
    %v2164 = vunpack.c.h.b16 %v2084
    %v2165 = vunpack.c.l.b16 %v2085
    %v2166 = vunpack.c.h.b16 %v2085
    %v2167 = vunpack.c.l.b16 %v2086
    %v2168 = vunpack.c.h.b16 %v2086
    %v2169 = vunpack.c.l.b16 %v2087
    %v2170 = vunpack.c.h.b16 %v2087
    %v2171 = vunpack.c.l.b16 %v2088
    %v2172 = vunpack.c.h.b16 %v2088
    %v2173 = vunpack.c.l.b16 %v2089
    %v2174 = vunpack.c.h.b16 %v2089
    %v2175 = vunpack.c.l.b16 %v2090
    %v2176 = vunpack.c.h.b16 %v2090
    %v2177 = vunpack.c.l.b16 %v2091
    %v2178 = vunpack.c.h.b16 %v2091
    %v2179 = vunpack.c.l.b16 %v2092
    %v2180 = vunpack.c.h.b16 %v2092
    %v2181 = vunpack.c.l.b16 %v2093
    %v2182 = vunpack.c.h.b16 %v2093
    %v2183 = vunpack.c.l.b16 %v2094
    %v2184 = vunpack.c.h.b16 %v2094
    %v2185 = vunpack.c.l.b16 %v2095
    %v2186 = vunpack.c.h.b16 %v2095
    %v2187 = vunpack.c.l.b16 %v2096
    %v2188 = vunpack.c.h.b16 %v2096
    %v2189 = vunpack.c.l.b16 %v2097
    %v2190 = vunpack.c.h.b16 %v2097
    %v2191 = vunpack.c.l.b16 %v2098
    %v2192 = vunpack.c.h.b16 %v2098
    %v2193 = vunpack.c.l.b16 %v2099
    %v2194 = vunpack.c.h.b16 %v2099
    %v2195 = vunpack.c.l.b16 %v2100
    %v2196 = vunpack.c.h.b16 %v2100
    %v2197 = vpack.c.b16 %v2135, %v2133
    %v2198 = vpack.c.b16 %v2136, %v2134
    %v2199 = vpack.c.b16 %v2139, %v2137
    %v2200 = vpack.c.b16 %v2140, %v2138
    %v2201 = vpack.c.b16 %v2143, %v2141
    %v2202 = vpack.c.b16 %v2144, %v2142
    %v2203 = vpack.c.b16 %v2147, %v2145
    %v2204 = vpack.c.b16 %v2148, %v2146
    %v2205 = vpack.c.b16 %v2151, %v2149
    %v2206 = vpack.c.b16 %v2152, %v2150
    %v2207 = vpack.c.b16 %v2155, %v2153
    %v2208 = vpack.c.b16 %v2156, %v2154
    %v2209 = vpack.c.b16 %v2159, %v2157
    %v2210 = vpack.c.b16 %v2160, %v2158
    %v2211 = vpack.c.b16 %v2163, %v2161
    %v2212 = vpack.c.b16 %v2164, %v2162
    %v2213 = vpack.c.b16 %v2167, %v2165
    %v2214 = vpack.c.b16 %v2168, %v2166
    %v2215 = vpack.c.b16 %v2171, %v2169
    %v2216 = vpack.c.b16 %v2172, %v2170
    %v2217 = vpack.c.b16 %v2175, %v2173
    %v2218 = vpack.c.b16 %v2176, %v2174
    %v2219 = vpack.c.b16 %v2179, %v2177
    %v2220 = vpack.c.b16 %v2180, %v2178
    %v2221 = vpack.c.b16 %v2183, %v2181
    %v2222 = vpack.c.b16 %v2184, %v2182
    %v2223 = vpack.c.b16 %v2187, %v2185
    %v2224 = vpack.c.b16 %v2188, %v2186
    %v2225 = vpack.c.b16 %v2191, %v2189
    %v2226 = vpack.c.b16 %v2192, %v2190
    %v2227 = vpack.c.b16 %v2195, %v2193
    %v2228 = vpack.c.b16 %v2196, %v2194
    %2261 = vmatprep.subr.bf16.mxu0 %v2198
    %2262 = vmatpush1.bf16.msra.mxu0 %v2197
    %2263 = vmatprep.subr.bf16.mxu0 %v2200
    %2264 = vmatpush1.bf16.msra.mxu0 %v2199
    %2265 = vmatprep.subr.bf16.mxu0 %v2202
    %2266 = vmatpush1.bf16.msra.mxu0 %v2201
    %2267 = vmatprep.subr.bf16.mxu0 %v2204
    %2268 = vmatpush1.bf16.msra.mxu0 %v2203
    %2269 = vmatprep.subr.bf16.mxu0 %v2206
    %2270 = vmatpush1.bf16.msra.mxu0 %v2205
    %2271 = vmatprep.subr.bf16.mxu0 %v2208
    %2272 = vmatpush1.bf16.msra.mxu0 %v2207
    %2273 = vmatprep.subr.bf16.mxu0 %v2210
    %2274 = vmatpush1.bf16.msra.mxu0 %v2209
    %2275 = vmatprep.subr.bf16.mxu0 %v2212
    %2276 = vmatpush1.bf16.msra.mxu0 %v2211
    %2277 = vmatprep.subr.bf16.mxu0 %v2214
    %2278 = vmatpush1.bf16.msra.mxu0 %v2213
    %2279 = vmatprep.subr.bf16.mxu0 %v2216
    %2280 = vmatpush1.bf16.msra.mxu0 %v2215
    %2281 = vmatprep.subr.bf16.mxu0 %v2218
    %2282 = vmatpush1.bf16.msra.mxu0 %v2217
    %2283 = vmatprep.subr.bf16.mxu0 %v2220
    %2284 = vmatpush1.bf16.msra.mxu0 %v2219
    %2285 = vmatprep.subr.bf16.mxu0 %v2222
    %2286 = vmatpush1.bf16.msra.mxu0 %v2221
    %2287 = vmatprep.subr.bf16.mxu0 %v2224
    %2288 = vmatpush1.bf16.msra.mxu0 %v2223
    %2289 = vmatprep.subr.bf16.mxu0 %v2226
    %2290 = vmatpush1.bf16.msra.mxu0 %v2225
    %2291 = vmatprep.subr.bf16.mxu0 %v2228
    %2292 = vmatpush1.bf16.msra.mxu0 %v2227
    %2293 = vmatprep.mubr.bf16.mxu0 %v1574
    %2294 = vmatmul.mubr.bf16.gmra.mrb[0].mxu0 %v1573
    %v2295 = vpop.f32.mrb[0].mxu0
    %v2296 = vadd.f32 0.0, %v2295
    %v2297 = vpop.f32.mrb[0].mxu0
    %v2298 = vadd.f32 0.0, %v2297
    %v2299 = vpop.f32.mrb[0].mxu0
    %v2300 = vadd.f32 0.0, %v2299
    %v2301 = vpop.f32.mrb[0].mxu0
    %v2302 = vadd.f32 0.0, %v2301
    %2303 = vmatprep.mubr.bf16.mxu0 %v1576
    %2304 = vmatmul.mubr.bf16.gmra.mrb[0].mxu0 %v1575
    %v2305 = vpop.f32.mrb[0].mxu0
    %v2306 = vadd.f32 0.0, %v2305
    %v2307 = vpop.f32.mrb[0].mxu0
    %v2308 = vadd.f32 0.0, %v2307
    %v2309 = vpop.f32.mrb[0].mxu0
    %v2310 = vadd.f32 0.0, %v2309
    %v2311 = vpop.f32.mrb[0].mxu0
    %v2312 = vadd.f32 0.0, %v2311
    %2313 = vdwg.mxu0
    %v2314 = vadd.f32 %v2050, %v2296
    %v2315 = vadd.f32 %v2052, %v2298
    %v2316 = vadd.f32 %v2054, %v2300
    %v2317 = vadd.f32 %v2056, %v2302
    %v2318 = vadd.f32 %v2060, %v2306
    %v2319 = vadd.f32 %v2062, %v2308
    %v2320 = vadd.f32 %v2064, %v2310
    %v2321 = vadd.f32 %v2066, %v2312
    %v2322 = vld [vmem:[%s10] sm:$0x3]
    %v2324 = vlaneseq
    %v2325 = vshrl.u32 %v2324, 7
    %v2326 = vsub.s32 0, %v2325
    %v2327 = vrot.slane %v2322, %v2326
    %v2328 = vlaneseq
    %v2329 = vshrl.u32 %v2328, 7
    %v2330 = vsub.s32 1, %v2329
    %v2331 = vrot.slane %v2322, %v2330
    %v2334 = vadd.f32 %v2314, %v2327
    %v2335 = vadd.f32 %v2315, %v2331
    %v2336 = vadd.f32 %v2316, %v2327
    %v2337 = vadd.f32 %v2317, %v2331
    %v2338 = vadd.f32 %v2318, %v2327
    %v2339 = vadd.f32 %v2319, %v2331
    %v2340 = vadd.f32 %v2320, %v2327
    %v2341 = vadd.f32 %v2321, %v2331
    %v2342 = vadd.f32 %v2334, %v2336
    %v2343 = vadd.f32 %v2342, %v2338
    %v2344 = vadd.f32 %v2343, %v2340
    %v2345 = vrot.slane %v2344, 4
    %v2346 = vadd.f32 %v2344, %v2345
    %v2347 = vrot.slane %v2346, 2
    %v2348 = vadd.f32 %v2346, %v2347
    %v2349 = vrot.slane %v2348, 1
    %v2350 = vadd.f32 %v2348, %v2349
    %v2351 = vadd.f32 %v2335, %v2337
    %v2352 = vadd.f32 %v2351, %v2339
    %v2353 = vadd.f32 %v2352, %v2341
    %v2354 = vrot.slane %v2353, 4
    %v2355 = vadd.f32 %v2353, %v2354
    %v2356 = vrot.slane %v2355, 2
    %v2357 = vadd.f32 %v2355, %v2356
    %v2358 = vrot.slane %v2357, 1
    %v2359 = vadd.f32 %v2357, %v2358
    %2360 = vmatprep.subr.mxu0 0.0
    %2361 = vmatpush1.msra.mxu0 %v1024
    %2362 = vmatprep.subr.mxu0 0.0
    %2363 = vmatpush1.msra.mxu0 %v1025
    %2364 = vmatprep.subr.mxu0 0.0
    %2365 = vmatpush1.msra.mxu0 %v1026
    %2366 = vmatprep.subr.mxu0 0.0
    %2367 = vmatpush1.msra.mxu0 %v1027
    %2368 = vmatprep.subr.mxu0 0.0
    %2369 = vmatpush1.msra.mxu0 %v1028
    %2370 = vmatprep.subr.mxu0 0.0
    %2371 = vmatpush1.msra.mxu0 %v1029
    %2372 = vmatprep.subr.mxu0 0.0
    %2373 = vmatpush1.msra.mxu0 %v1030
    %2374 = vmatprep.subr.mxu0 0.0
    %2375 = vmatpush1.msra.mxu0 %v1031
    %2376 = vmatprep.subr.mxu0 0.0
    %2377 = vmatpush1.msra.mxu0 %v1032
    %2378 = vmatprep.subr.mxu0 0.0
    %2379 = vmatpush1.msra.mxu0 %v1033
    %2380 = vmatprep.subr.mxu0 0.0
    %2381 = vmatpush1.msra.mxu0 %v1034
    %2382 = vmatprep.subr.mxu0 0.0
    %2383 = vmatpush1.msra.mxu0 %v1035
    %2384 = vmatprep.subr.mxu0 0.0
    %2385 = vmatpush1.msra.mxu0 %v1036
    %2386 = vmatprep.subr.mxu0 0.0
    %2387 = vmatpush1.msra.mxu0 %v1037
    %2388 = vmatprep.subr.mxu0 0.0
    %2389 = vmatpush1.msra.mxu0 %v1038
    %2390 = vmatprep.subr.mxu0 0.0
    %2391 = vmatpush1.msra.mxu0 %v1039
    %2392 = vmatprep.subr.mxu0 0.0
    %2393 = vmatpush1.msra.mxu0 %v1040
    %2394 = vmatprep.subr.mxu0 0.0
    %2395 = vmatpush1.msra.mxu0 %v1041
    %2396 = vmatprep.subr.mxu0 0.0
    %2397 = vmatpush1.msra.mxu0 %v1042
    %2398 = vmatprep.subr.mxu0 0.0
    %2399 = vmatpush1.msra.mxu0 %v1043
    %2400 = vmatprep.subr.mxu0 0.0
    %2401 = vmatpush1.msra.mxu0 %v1044
    %2402 = vmatprep.subr.mxu0 0.0
    %2403 = vmatpush1.msra.mxu0 %v1045
    %2404 = vmatprep.subr.mxu0 0.0
    %2405 = vmatpush1.msra.mxu0 %v1046
    %2406 = vmatprep.subr.mxu0 0.0
    %2407 = vmatpush1.msra.mxu0 %v1047
    %2408 = vmatprep.subr.mxu0 0.0
    %2409 = vmatpush1.msra.mxu0 %v1048
    %2410 = vmatprep.subr.mxu0 0.0
    %2411 = vmatpush1.msra.mxu0 %v1049
    %2412 = vmatprep.subr.mxu0 0.0
    %2413 = vmatpush1.msra.mxu0 %v1050
    %2414 = vmatprep.subr.mxu0 0.0
    %2415 = vmatpush1.msra.mxu0 %v1051
    %2416 = vmatprep.subr.mxu0 0.0
    %2417 = vmatpush1.msra.mxu0 %v1052
    %2418 = vmatprep.subr.mxu0 0.0
    %2419 = vmatpush1.msra.mxu0 %v1053
    %2420 = vmatprep.subr.mxu0 0.0
    %2421 = vmatpush1.msra.mxu0 %v1054
    %2422 = vmatprep.subr.mxu0 0.0
    %2423 = vmatpush1.msra.mxu0 %v1055
    %2424 = vmatprep.mubr.f32.mxu0 %v2359
    %2425 = vmatmul.mubr.f32.gmra.mrb[0].mxu0 %v2350
    %v2426 = vpop.f32.mrb[0].mxu0
    %v2427 = vadd.f32 0.0, %v2426
    %v2428 = vpop.f32.mrb[0].mxu0
    %2429 = vdwg.mxu0
    %v2430 = vmul.f32 %v2427, 0.001953125
    %v2432 = vsel %vm1131, %v2430, 0
    %2434 = vmatprep.subr.mxu0 %v1128
    %2435 = vmatpush1.msra.mxu0 %v1127
    %2436 = vmatprep.subr.mxu0 %v1130
    %2437 = vmatpush1.msra.mxu0 %v1129
    %2438 = vmatprep.subr.mxu0 0.0
    %2439 = vmatpush1.msra.mxu0 0.0
    %2440 = vmatprep.subr.mxu0 0.0
    %2441 = vmatpush1.msra.mxu0 0.0
    %2442 = vmatprep.subr.mxu0 0.0
    %2443 = vmatpush1.msra.mxu0 0.0
    %2444 = vmatprep.subr.mxu0 0.0
    %2445 = vmatpush1.msra.mxu0 0.0
    %2446 = vmatprep.subr.mxu0 0.0
    %2447 = vmatpush1.msra.mxu0 0.0
    %2448 = vmatprep.subr.mxu0 0.0
    %2449 = vmatpush1.msra.mxu0 0.0
    %2450 = vmatprep.subr.mxu0 0.0
    %2451 = vmatpush1.msra.mxu0 0.0
    %2452 = vmatprep.subr.mxu0 0.0
    %2453 = vmatpush1.msra.mxu0 0.0
    %2454 = vmatprep.subr.mxu0 0.0
    %2455 = vmatpush1.msra.mxu0 0.0
    %2456 = vmatprep.subr.mxu0 0.0
    %2457 = vmatpush1.msra.mxu0 0.0
    %2458 = vmatprep.subr.mxu0 0.0
    %2459 = vmatpush1.msra.mxu0 0.0
    %2460 = vmatprep.subr.mxu0 0.0
    %2461 = vmatpush1.msra.mxu0 0.0
    %2462 = vmatprep.subr.mxu0 0.0
    %2463 = vmatpush1.msra.mxu0 0.0
    %2464 = vmatprep.subr.mxu0 0.0
    %2465 = vmatpush1.msra.mxu0 0.0
    %2466 = vmatprep.subr.mxu0 0.0
    %2467 = vmatpush1.msra.mxu0 0.0
    %2468 = vmatprep.subr.mxu0 0.0
    %2469 = vmatpush1.msra.mxu0 0.0
    %2470 = vmatprep.subr.mxu0 0.0
    %2471 = vmatpush1.msra.mxu0 0.0
    %2472 = vmatprep.subr.mxu0 0.0
    %2473 = vmatpush1.msra.mxu0 0.0
    %2474 = vmatprep.subr.mxu0 0.0
    %2475 = vmatpush1.msra.mxu0 0.0
    %2476 = vmatprep.subr.mxu0 0.0
    %2477 = vmatpush1.msra.mxu0 0.0
    %2478 = vmatprep.subr.mxu0 0.0
    %2479 = vmatpush1.msra.mxu0 0.0
    %2480 = vmatprep.subr.mxu0 0.0
    %2481 = vmatpush1.msra.mxu0 0.0
    %2482 = vmatprep.subr.mxu0 0.0
    %2483 = vmatpush1.msra.mxu0 0.0
    %2484 = vmatprep.subr.mxu0 0.0
    %2485 = vmatpush1.msra.mxu0 0.0
    %2486 = vmatprep.subr.mxu0 0.0
    %2487 = vmatpush1.msra.mxu0 0.0
    %2488 = vmatprep.subr.mxu0 0.0
    %2489 = vmatpush1.msra.mxu0 0.0
    %2490 = vmatprep.subr.mxu0 0.0
    %2491 = vmatpush1.msra.mxu0 0.0
    %2492 = vmatprep.subr.mxu0 0.0
    %2493 = vmatpush1.msra.mxu0 0.0
    %2494 = vmatprep.subr.mxu0 0.0
    %2495 = vmatpush1.msra.mxu0 0.0
    %2496 = vmatprep.subr.mxu0 0.0
    %2497 = vmatpush1.msra.mxu0 0.0
    %2498 = vmatprep.mubr.f32.mxu0 0.0
    %2499 = vmatmul.mubr.f32.gmra.mrb[0].mxu0 %v2432
    %v2500 = vpop.f32.mrb[0].mxu0
    %v2501 = vadd.f32 0.0, %v2500
    %v2502 = vpop.f32.mrb[0].mxu0
    %v2503 = vadd.f32 0.0, %v2502
    %2504 = vdwg.mxu0
    %v2505 = vlaneseq
    %v2506 = vshrl.u32 %v2505, 7
    %v2507 = vsub.s32 0, %v2506
    %v2508 = vrot.slane %v2501, %v2507
    %v2509 = vlaneseq
    %v2510 = vshrl.u32 %v2509, 7
    %v2511 = vsub.s32 0, %v2510
    %v2512 = vrot.slane %v2503, %v2511
    %v2513 = vsub.f32 %v2334, %v2508
    %v2514 = vsub.f32 %v2335, %v2512
    %v2515 = vsub.f32 %v2336, %v2508
    %v2516 = vsub.f32 %v2337, %v2512
    %v2517 = vsub.f32 %v2338, %v2508
    %v2518 = vsub.f32 %v2339, %v2512
    %v2519 = vsub.f32 %v2340, %v2508
    %v2520 = vsub.f32 %v2341, %v2512
    %v2521 = vmul.f32 %v2513, %v2513
    %v2522 = vmul.f32 %v2514, %v2514
    %v2523 = vmul.f32 %v2515, %v2515
    %v2524 = vmul.f32 %v2516, %v2516
    %v2525 = vmul.f32 %v2517, %v2517
    %v2526 = vmul.f32 %v2518, %v2518
    %v2527 = vmul.f32 %v2519, %v2519
    %v2528 = vmul.f32 %v2520, %v2520
    %v2529 = vadd.f32 %v2521, %v2523
    %v2530 = vadd.f32 %v2529, %v2525
    %v2531 = vadd.f32 %v2530, %v2527
    %v2532 = vrot.slane %v2531, 4
    %v2533 = vadd.f32 %v2531, %v2532
    %v2534 = vrot.slane %v2533, 2
    %v2535 = vadd.f32 %v2533, %v2534
    %v2536 = vrot.slane %v2535, 1
    %v2537 = vadd.f32 %v2535, %v2536
    %v2538 = vadd.f32 %v2522, %v2524
    %v2539 = vadd.f32 %v2538, %v2526
    %v2540 = vadd.f32 %v2539, %v2528
    %v2541 = vrot.slane %v2540, 4
    %v2542 = vadd.f32 %v2540, %v2541
    %v2543 = vrot.slane %v2542, 2
    %v2544 = vadd.f32 %v2542, %v2543
    %v2545 = vrot.slane %v2544, 1
    %v2546 = vadd.f32 %v2544, %v2545
    %2547 = vmatprep.subr.mxu0 0.0
    %2548 = vmatpush1.msra.mxu0 %v1024
    %2549 = vmatprep.subr.mxu0 0.0
    %2550 = vmatpush1.msra.mxu0 %v1025
    %2551 = vmatprep.subr.mxu0 0.0
    %2552 = vmatpush1.msra.mxu0 %v1026
    %2553 = vmatprep.subr.mxu0 0.0
    %2554 = vmatpush1.msra.mxu0 %v1027
    %2555 = vmatprep.subr.mxu0 0.0
    %2556 = vmatpush1.msra.mxu0 %v1028
    %2557 = vmatprep.subr.mxu0 0.0
    %2558 = vmatpush1.msra.mxu0 %v1029
    %2559 = vmatprep.subr.mxu0 0.0
    %2560 = vmatpush1.msra.mxu0 %v1030
    %2561 = vmatprep.subr.mxu0 0.0
    %2562 = vmatpush1.msra.mxu0 %v1031
    %2563 = vmatprep.subr.mxu0 0.0
    %2564 = vmatpush1.msra.mxu0 %v1032
    %2565 = vmatprep.subr.mxu0 0.0
    %2566 = vmatpush1.msra.mxu0 %v1033
    %2567 = vmatprep.subr.mxu0 0.0
    %2568 = vmatpush1.msra.mxu0 %v1034
    %2569 = vmatprep.subr.mxu0 0.0
    %2570 = vmatpush1.msra.mxu0 %v1035
    %2571 = vmatprep.subr.mxu0 0.0
    %2572 = vmatpush1.msra.mxu0 %v1036
    %2573 = vmatprep.subr.mxu0 0.0
    %2574 = vmatpush1.msra.mxu0 %v1037
    %2575 = vmatprep.subr.mxu0 0.0
    %2576 = vmatpush1.msra.mxu0 %v1038
    %2577 = vmatprep.subr.mxu0 0.0
    %2578 = vmatpush1.msra.mxu0 %v1039
    %2579 = vmatprep.subr.mxu0 0.0
    %2580 = vmatpush1.msra.mxu0 %v1040
    %2581 = vmatprep.subr.mxu0 0.0
    %2582 = vmatpush1.msra.mxu0 %v1041
    %2583 = vmatprep.subr.mxu0 0.0
    %2584 = vmatpush1.msra.mxu0 %v1042
    %2585 = vmatprep.subr.mxu0 0.0
    %2586 = vmatpush1.msra.mxu0 %v1043
    %2587 = vmatprep.subr.mxu0 0.0
    %2588 = vmatpush1.msra.mxu0 %v1044
    %2589 = vmatprep.subr.mxu0 0.0
    %2590 = vmatpush1.msra.mxu0 %v1045
    %2591 = vmatprep.subr.mxu0 0.0
    %2592 = vmatpush1.msra.mxu0 %v1046
    %2593 = vmatprep.subr.mxu0 0.0
    %2594 = vmatpush1.msra.mxu0 %v1047
    %2595 = vmatprep.subr.mxu0 0.0
    %2596 = vmatpush1.msra.mxu0 %v1048
    %2597 = vmatprep.subr.mxu0 0.0
    %2598 = vmatpush1.msra.mxu0 %v1049
    %2599 = vmatprep.subr.mxu0 0.0
    %2600 = vmatpush1.msra.mxu0 %v1050
    %2601 = vmatprep.subr.mxu0 0.0
    %2602 = vmatpush1.msra.mxu0 %v1051
    %2603 = vmatprep.subr.mxu0 0.0
    %2604 = vmatpush1.msra.mxu0 %v1052
    %2605 = vmatprep.subr.mxu0 0.0
    %2606 = vmatpush1.msra.mxu0 %v1053
    %2607 = vmatprep.subr.mxu0 0.0
    %2608 = vmatpush1.msra.mxu0 %v1054
    %2609 = vmatprep.subr.mxu0 0.0
    %2610 = vmatpush1.msra.mxu0 %v1055
    %2611 = vmatprep.mubr.f32.mxu0 %v2546
    %2612 = vmatmul.mubr.f32.gmra.mrb[0].mxu0 %v2537
    %v2613 = vpop.f32.mrb[0].mxu0
    %v2614 = vadd.f32 0.0, %v2613
    %v2615 = vpop.f32.mrb[0].mxu0
    %2616 = vdwg.mxu0
    %v2617 = vmul.f32 %v2614, 0.001953125
    %v2619 = vsel %vm1131, %v2617, 0
    %2621 = vmatprep.subr.mxu0 %v1128
    %2622 = vmatpush1.msra.mxu0 %v1127
    %2623 = vmatprep.subr.mxu0 %v1130
    %2624 = vmatpush1.msra.mxu0 %v1129
    %2625 = vmatprep.subr.mxu0 0.0
    %2626 = vmatpush1.msra.mxu0 0.0
    %2627 = vmatprep.subr.mxu0 0.0
    %2628 = vmatpush1.msra.mxu0 0.0
    %2629 = vmatprep.subr.mxu0 0.0
    %2630 = vmatpush1.msra.mxu0 0.0
    %2631 = vmatprep.subr.mxu0 0.0
    %2632 = vmatpush1.msra.mxu0 0.0
    %2633 = vmatprep.subr.mxu0 0.0
    %2634 = vmatpush1.msra.mxu0 0.0
    %2635 = vmatprep.subr.mxu0 0.0
    %2636 = vmatpush1.msra.mxu0 0.0
    %2637 = vmatprep.subr.mxu0 0.0
    %2638 = vmatpush1.msra.mxu0 0.0
    %2639 = vmatprep.subr.mxu0 0.0
    %2640 = vmatpush1.msra.mxu0 0.0
    %2641 = vmatprep.subr.mxu0 0.0
    %2642 = vmatpush1.msra.mxu0 0.0
    %2643 = vmatprep.subr.mxu0 0.0
    %2644 = vmatpush1.msra.mxu0 0.0
    %2645 = vmatprep.subr.mxu0 0.0
    %2646 = vmatpush1.msra.mxu0 0.0
    %2647 = vmatprep.subr.mxu0 0.0
    %2648 = vmatpush1.msra.mxu0 0.0
    %2649 = vmatprep.subr.mxu0 0.0
    %2650 = vmatpush1.msra.mxu0 0.0
    %2651 = vmatprep.subr.mxu0 0.0
    %2652 = vmatpush1.msra.mxu0 0.0
    %2653 = vmatprep.subr.mxu0 0.0
    %2654 = vmatpush1.msra.mxu0 0.0
    %2655 = vmatprep.subr.mxu0 0.0
    %2656 = vmatpush1.msra.mxu0 0.0
    %2657 = vmatprep.subr.mxu0 0.0
    %2658 = vmatpush1.msra.mxu0 0.0
    %2659 = vmatprep.subr.mxu0 0.0
    %2660 = vmatpush1.msra.mxu0 0.0
    %2661 = vmatprep.subr.mxu0 0.0
    %2662 = vmatpush1.msra.mxu0 0.0
    %2663 = vmatprep.subr.mxu0 0.0
    %2664 = vmatpush1.msra.mxu0 0.0
    %2665 = vmatprep.subr.mxu0 0.0
    %2666 = vmatpush1.msra.mxu0 0.0
    %2667 = vmatprep.subr.mxu0 0.0
    %2668 = vmatpush1.msra.mxu0 0.0
    %2669 = vmatprep.subr.mxu0 0.0
    %2670 = vmatpush1.msra.mxu0 0.0
    %2671 = vmatprep.subr.mxu0 0.0
    %2672 = vmatpush1.msra.mxu0 0.0
    %2673 = vmatprep.subr.mxu0 0.0
    %2674 = vmatpush1.msra.mxu0 0.0
    %2675 = vmatprep.subr.mxu0 0.0
    %2676 = vmatpush1.msra.mxu0 0.0
    %2677 = vmatprep.subr.mxu0 0.0
    %2678 = vmatpush1.msra.mxu0 0.0
    %2679 = vmatprep.subr.mxu0 0.0
    %2680 = vmatpush1.msra.mxu0 0.0
    %2681 = vmatprep.subr.mxu0 0.0
    %2682 = vmatpush1.msra.mxu0 0.0
    %2683 = vmatprep.subr.mxu0 0.0
    %2684 = vmatpush1.msra.mxu0 0.0
    %2685 = vmatprep.mubr.f32.mxu0 0.0
    %2686 = vmatmul.mubr.f32.gmra.mrb[0].mxu0 %v2619
    %v2687 = vpop.f32.mrb[0].mxu0
    %v2688 = vadd.f32 1e-05, %v2687
    %v2689 = vpop.f32.mrb[0].mxu0
    %v2690 = vadd.f32 1e-05, %v2689
    %2691 = vdwg.mxu0
    %v2692 = vrsqrt.pop %v2688
    %v2693 = vrsqrt.pop %v2690
    %v2694 = vlaneseq
    %v2695 = vshrl.u32 %v2694, 7
    %v2696 = vsub.s32 0, %v2695
    %v2697 = vrot.slane %v2692, %v2696
    %v2698 = vlaneseq
    %v2699 = vshrl.u32 %v2698, 7
    %v2700 = vsub.s32 0, %v2699
    %v2701 = vrot.slane %v2693, %v2700
    %v2702 = vmul.f32 %v2513, %v2697
    %v2703 = vmul.f32 %v2514, %v2701
    %v2704 = vmul.f32 %v2515, %v2697
    %v2705 = vmul.f32 %v2516, %v2701
    %v2706 = vmul.f32 %v2517, %v2697
    %v2707 = vmul.f32 %v2518, %v2701
    %v2708 = vmul.f32 %v2519, %v2697
    %v2709 = vmul.f32 %v2520, %v2701
    %v2710 = vld [vmem:[%s11] sm:$0x3]
    %v2712 = vlaneseq
    %v2713 = vshrl.u32 %v2712, 7
    %v2714 = vsub.s32 0, %v2713
    %v2715 = vrot.slane %v2710, %v2714
    %v2716 = vlaneseq
    %v2717 = vshrl.u32 %v2716, 7
    %v2718 = vsub.s32 1, %v2717
    %v2719 = vrot.slane %v2710, %v2718
    %v2722 = vmul.f32 %v2702, %v2715
    %v2723 = vmul.f32 %v2703, %v2719
    %v2724 = vmul.f32 %v2704, %v2715
    %v2725 = vmul.f32 %v2705, %v2719
    %v2726 = vmul.f32 %v2706, %v2715
    %v2727 = vmul.f32 %v2707, %v2719
    %v2728 = vmul.f32 %v2708, %v2715
    %v2729 = vmul.f32 %v2709, %v2719
    %v2730 = vld [vmem:[%s12] sm:$0x3]
    %v2732 = vlaneseq
    %v2733 = vshrl.u32 %v2732, 7
    %v2734 = vsub.s32 0, %v2733
    %v2735 = vrot.slane %v2730, %v2734
    %v2736 = vlaneseq
    %v2737 = vshrl.u32 %v2736, 7
    %v2738 = vsub.s32 1, %v2737
    %v2739 = vrot.slane %v2730, %v2738
    %v2742 = vadd.f32 %v2722, %v2735
    %v2743 = vadd.f32 %v2723, %v2739
    %v2744 = vadd.f32 %v2724, %v2735
    %v2745 = vadd.f32 %v2725, %v2739
    %v2746 = vadd.f32 %v2726, %v2735
    %v2747 = vadd.f32 %v2727, %v2739
    %v2748 = vadd.f32 %v2728, %v2735
    %v2749 = vadd.f32 %v2729, %v2739
    %v2750 = vadd.f32 %v2742, %v74
    %v2751 = vadd.f32 %v2743, %v75
    %v2752 = vadd.f32 %v2744, %v76
    %v2753 = vadd.f32 %v2745, %v77
    %v2754 = vadd.f32 %v2746, %v78
    %v2755 = vadd.f32 %v2747, %v79
    %v2756 = vadd.f32 %v2748, %v80
    %v2757 = vadd.f32 %v2749, %v81
    %v2758 = vmax.f32 %v2750, 0.0
    %v2759 = vmax.f32 %v2751, 0.0
    %v2760 = vmax.f32 %v2752, 0.0
    %v2761 = vmax.f32 %v2753, 0.0
    %v2762 = vmax.f32 %v2754, 0.0
    %v2763 = vmax.f32 %v2755, 0.0
    %v2764 = vmax.f32 %v2756, 0.0
    %v2765 = vmax.f32 %v2757, 0.0
    %2766 = vst [vmem:[#allocation7] sm:$0xff] %v2758
    %2767 = vst [vmem:[#allocation7 + $0x8] sm:$0xff] %v2759
    %2768 = vst [vmem:[#allocation7 + $0x10] sm:$0xff] %v2760
    %2769 = vst [vmem:[#allocation7 + $0x18] sm:$0xff] %v2761
    %2770 = vst [vmem:[#allocation7 + $0x20] sm:$0xff] %v2762
    %2771 = vst [vmem:[#allocation7 + $0x28] sm:$0xff] %v2763
    %2772 = vst [vmem:[#allocation7 + $0x30] sm:$0xff] %v2764
    %2773 = vst [vmem:[#allocation7 + $0x38] sm:$0xff] %v2765
    // Predicated region
    $region62: #{tpu_custom_call.1} parent=1 // pred_check
      _
    $region63: #{tpu_custom_call.1} parent=1 // pred_check_branch
      %2775 = sbr.rel (0) target = $region65
    $region64: #{tpu_custom_call.1} parent=1 // pred_region
      %s2777 = ssub.s32 1024, 1024
      %2778 = vsyncadd [#allocation4], %s2777
      %s2779 = sshll.u32 [#allocation7], 4
      %s2780 = int_to_ptr.vmem [resolvable:$true] %s2779
      %2785 = dma.vmem_to_hbm [thread:$0]  %s2780, 1024, %s13, [#allocation4], 256, 256, 16
    $region65: #{tpu_custom_call.1} parent=1 // pred_fallthru
      _
    // Predicated region
    $region66: #{tpu_custom_call.1} parent=1 // pred_check
      _
    $region67: #{tpu_custom_call.1} parent=1 // pred_check_branch
      %2787 = sbr.rel (0) target = $region69
    $region68: #{tpu_custom_call.1} parent=1 // pred_region
      %2788 = dma.done [#allocation4], 1024
    $region69: #{tpu_custom_call.1} parent=1 // pred_fallthru
      _
    %2789 = vsyncpa [#allocation3], 1
    %2790 = vsyncpa [#allocation6], 1
    %2791 = vsyncpa [#allocation4], 1

</llo_original>
